<compile_context>
chip_gen: v5e
topology: v5e:2x2
jax: 0.10.0
libtpu: 0.0.40
codegen_flags: <defaults>
</compile_context>

<pallas_src>
import functools
import math

import jax
import jax.numpy as jnp
from jax import lax
from jax.experimental import pallas as pl
from jax.experimental.pallas import tpu as pltpu


def _round_up(x, m):
    return ((x + m - 1) // m) * m


def _vmem_capacity_bytes():
    """Physical VMEM per TensorCore, with a conservative (v7x) fallback."""
    try:
        info = pltpu.get_tpu_info()
        cap = int(getattr(info, "vmem_capacity_bytes", 0))
        if cap > 0:
            return cap
    except Exception:
        pass
    return 64 << 20


# ---------------------------------------------------------------------------
# Kernel bodies
# ---------------------------------------------------------------------------


def _layernorm_relu(y_f32, gamma_ref, beta_ref, *, d_out_valid, d_out_padded, eps,
                    out_dtype):
    """LayerNorm (over valid columns) + ReLU on an f32 (tile_b, d_out_padded) tile."""
    inv_n = 1.0 / d_out_valid
    # Padded output columns are exactly zero (zero weight cols / zero bias), so plain
    # sums over the padded axis equal sums over the valid columns.
    mean = jnp.sum(y_f32, axis=-1, keepdims=True) * inv_n
    centered = y_f32 - mean
    if d_out_padded == d_out_valid:
        sq = centered * centered
    else:
        lane = lax.broadcasted_iota(jnp.int32, (1, d_out_padded), 1)
        sq = jnp.where(lane < d_out_valid, centered * centered, 0.0)
    var = jnp.sum(sq, axis=-1, keepdims=True) * inv_n

    y_norm = centered * lax.rsqrt(var + eps)          # rsqrt -> EUP slot
    y_norm = (y_norm * gamma_ref[...].astype(jnp.float32)
              + beta_ref[...].astype(jnp.float32))

    # Activation: ReLU.  Dropout: identity at inference time.
    # TODO(synk): training-mode dropout (pltpu.prng_seed/prng_random_bits mask) and
    # other Activation(str) choices intentionally omitted; ReLU implemented.
    return jnp.maximum(y_norm, 0.0).astype(out_dtype)


def _mlp_kernel_resident(x_ref, w_ref, b_ref, gamma_ref, beta_ref, o_ref, *,
                         d_out_valid, d_out_padded, eps):
    """Weight-resident path: one grid axis over batch tiles, full weight in VMEM."""
    y = jnp.dot(x_ref[...], w_ref[...], preferred_element_type=jnp.float32)
    y = y + b_ref[...].astype(jnp.float32)
    o_ref[...] = _layernorm_relu(y, gamma_ref, beta_ref, d_out_valid=d_out_valid,
                                 d_out_padded=d_out_padded, eps=eps,
                                 out_dtype=o_ref.dtype)


def _mlp_kernel_ktiled(x_ref, w_ref, b_ref, gamma_ref, beta_ref, o_ref, acc_ref, *,
                       d_out_valid, d_out_padded, eps):
    """K-tiled path: (batch-tile, K-tile) grid with an f32 accumulator."""
    k = pl.program_id(1)

    @pl.when(k == 0)
    def _init():
        # Initialize the accumulator with the broadcast bias -> no bias add in the
        # serial epilogue.
        acc_ref[...] = jnp.zeros_like(acc_ref) + b_ref[...].astype(jnp.float32)

    # MXU matmul on native-dtype operands; accumulation stays f32.
    acc_ref[...] += jnp.dot(x_ref[...], w_ref[...],
                            preferred_element_type=jnp.float32)

    @pl.when(k == pl.num_programs(1) - 1)
    def _epilogue():
        o_ref[...] = _layernorm_relu(acc_ref[...], gamma_ref, beta_ref,
                                     d_out_valid=d_out_valid,
                                     d_out_padded=d_out_padded, eps=eps,
                                     out_dtype=o_ref.dtype)


# ---------------------------------------------------------------------------
# Tiling selection (all static / shape-derived)
# ---------------------------------------------------------------------------


def _select_tiling(B, d_in_p, d_out_p, itemsize):
    vmem_cap = _vmem_capacity_bytes()
    usable = max(16 << 20, vmem_cap - (8 << 20))     # leave Mosaic scratch headroom

    # --- batch tile: large (amortizes weight streaming), VMEM-aware, and keeping at
    # least 2 tiles when the batch allows so v7x megacore gets both TensorCores.
    per_row_bytes = 4 * d_out_p + 2 * itemsize * d_out_p   # f32 acc + dbl-buffered out
    max_tile_b = max(8, (usable // 2) // max(per_row_bytes, 1))
    tile_b = min(512, max_tile_b)
    B8 = _round_up(B, 8)
    if B8 <= tile_b:
        if B8 > 256:
            tile_b = _round_up(-(-B8 // 2), 8)       # 2 batch tiles
        else:
            tile_b = B8
    tile_b = max(8, (tile_b // 8) * 8)

    # --- K tile (only used on the ktiled path): largest 128-multiple divisor of
    # d_in_p that is <= 512.
    tile_k = 128
    for cand in (512, 384, 256, 128):
        if cand <= d_in_p and d_in_p % cand == 0:
            tile_k = cand
            break

    # --- weight-resident fast path decision.
    w_bytes = d_in_p * d_out_p * itemsize
    resident_budget = min(usable // 3, 24 << 20)
    resident_total = (2 * w_bytes                          # weight buffers
                      + 2 * tile_b * d_in_p * itemsize     # x tiles
                      + 2 * tile_b * d_out_p * itemsize    # out tiles
                      + 6 * d_out_p * itemsize)            # b/gamma/beta
    weight_resident = (w_bytes <= resident_budget) and (resident_total <= usable)

    return tile_b, tile_k, weight_resident, vmem_cap


# ---------------------------------------------------------------------------
# Forward
# ---------------------------------------------------------------------------


@functools.partial(jax.jit, static_argnames=("d_out_valid", "eps", "force_path"))
def _mlp_block_impl(x, w_p, b_p, gamma_p, beta_p, *, d_out_valid, eps, force_path):
    B, d_in = x.shape
    d_in_p, d_out_p = w_p.shape
    itemsize = jnp.dtype(x.dtype).itemsize

    tile_b, tile_k, resident, vmem_cap = _select_tiling(B, d_in_p, d_out_p, itemsize)
    if force_path == "resident":
        resident = True
    elif force_path == "ktiled":
        resident = False

    B_p = _round_up(B, tile_b)
    nb = B_p // tile_b
    # Only x is padded per call (batch remainder + feature alignment); the weight and
    # the LayerNorm parameters were padded once in prepare_mlp_params().
    x_p = jnp.pad(x, ((0, B_p - B), (0, d_in_p - d_in)))

    if resident:
        vmem_needed = (2 * tile_b * d_in_p * itemsize
                       + 2 * d_in_p * d_out_p * itemsize
                       + 2 * tile_b * d_out_p * itemsize
                       + 6 * d_out_p * itemsize)
        grid = (nb,)
        in_specs = [
            pl.BlockSpec((tile_b, d_in_p), lambda i: (i, 0)),     # x batch tile
            pl.BlockSpec((d_in_p, d_out_p), lambda i: (0, 0)),    # full weight (once)
            pl.BlockSpec((1, d_out_p), lambda i: (0, 0)),         # bias
            pl.BlockSpec((1, d_out_p), lambda i: (0, 0)),         # ln gamma
            pl.BlockSpec((1, d_out_p), lambda i: (0, 0)),         # ln beta
        ]
        out_specs = pl.BlockSpec((tile_b, d_out_p), lambda i: (i, 0))
        scratch_shapes = []
        dim_sem = ("parallel",)
        kernel = functools.partial(_mlp_kernel_resident, d_out_valid=d_out_valid,
                                   d_out_padded=d_out_p, eps=eps)
        weight_hbm_reads = 1
    else:
        nk = d_in_p // tile_k
        vmem_needed = (2 * tile_b * tile_k * itemsize
                       + 2 * tile_k * d_out_p * itemsize
                       + 2 * tile_b * d_out_p * itemsize
                       + 4 * tile_b * d_out_p                     # f32 acc scratch
                       + 6 * d_out_p * itemsize)

        # Serpentine K ordering: odd batch tiles walk K in reverse so the boundary
        # weight tile is reused across consecutive batch tiles (DMA skipped).
        def _x_map(i, k):
            k_eff = k + (i % 2) * (nk - 1 - 2 * k)
            return (i, k_eff)

        def _w_map(i, k):
            k_eff = k + (i % 2) * (nk - 1 - 2 * k)
            return (k_eff, 0)

        grid = (nb, nk)
        in_specs = [
            pl.BlockSpec((tile_b, tile_k), _x_map),               # x tile
            pl.BlockSpec((tile_k, d_out_p), _w_map),              # weight K-tile
            pl.BlockSpec((1, d_out_p), lambda i, k: (0, 0)),      # bias
            pl.BlockSpec((1, d_out_p), lambda i, k: (0, 0)),      # ln gamma
            pl.BlockSpec((1, d_out_p), lambda i, k: (0, 0)),      # ln beta
        ]
        out_specs = pl.BlockSpec((tile_b, d_out_p), lambda i, k: (i, 0))
        scratch_shapes = [pltpu.VMEM((tile_b, d_out_p), jnp.float32)]
        dim_sem = ("parallel", "arbitrary")
        kernel = functools.partial(_mlp_kernel_ktiled, d_out_valid=d_out_valid,
                                   d_out_padded=d_out_p, eps=eps)
        weight_hbm_reads = nb

    vmem_limit = min(vmem_cap - (4 << 20),
                     max(16 << 20, int(1.25 * vmem_needed) + (2 << 20)))

    cost = pl.CostEstimate(
        flops=2 * B_p * d_in_p * d_out_p,
        transcendentals=B_p,  # one rsqrt per output row
        bytes_accessed=itemsize * (B_p * d_in_p
                                   + weight_hbm_reads * d_in_p * d_out_p
                                   + B_p * d_out_p
                                   + 3 * d_out_p),
    )

    out_p = pl.pallas_call(
        kernel,
        out_shape=jax.ShapeDtypeStruct((B_p, d_out_p), x.dtype),
        grid_spec=pltpu.PrefetchScalarGridSpec(
            num_scalar_prefetch=0,
            grid=grid,
            in_specs=in_specs,
            out_specs=out_specs,
            scratch_shapes=scratch_shapes,
        ),
        compiler_params=pltpu.CompilerParams(
            dimension_semantics=dim_sem,
            vmem_limit_bytes=vmem_limit,
        ),
        cost_estimate=cost,
    )(x_p, w_p, b_p, gamma_p, beta_p)

    return out_p[:B, :d_out_valid]


def prepare_mlp_params(w_t, b, gamma, beta):
    """One-time parameter prep: pad weight / bias / gamma / beta to lane-aligned
    shapes so no O(d_in*d_out) padding happens in the per-call hot path.

    w_t: [d_in, d_out] (transposed vs torch's [out, in]); b/gamma/beta: [d_out]-like.
    """
    d_in, d_out = w_t.shape
    d_in_p = _round_up(d_in, 128)
    d_out_p = _round_up(d_out, 128)
    w_p = jnp.pad(w_t, ((0, d_in_p - d_in), (0, d_out_p - d_out)))
    b_p = jnp.pad(jnp.reshape(b, (1, d_out)), ((0, 0), (0, d_out_p - d_out)))
    gamma_p = jnp.pad(jnp.reshape(gamma, (1, d_out)), ((0, 0), (0, d_out_p - d_out)))
    beta_p = jnp.pad(jnp.reshape(beta, (1, d_out)), ((0, 0), (0, d_out_p - d_out)))
    return {"w": w_p, "b": b_p, "gamma": gamma_p, "beta": beta_p, "d_out": d_out}


def mlp_block(x, params, *, eps=1e-5, force_path=None):
    """Fused Linear -> LayerNorm -> ReLU -> Dropout(eval) forward.

    x: [B, D_in]; params: output of prepare_mlp_params().  Returns [B, D_out] in
    x.dtype.  force_path in {None, "resident", "ktiled"} (testing only).
    """
    return _mlp_block_impl(x, params["w"], params["b"], params["gamma"],
                           params["beta"], d_out_valid=params["d_out"], eps=eps,
                           force_path=force_path)


# ---------------------------------------------------------------------------
# Reference + tests
# ---------------------------------------------------------------------------


def _reference(x, w_t, b, gamma, beta, eps=1e-5):
    f32 = jnp.float32
    y = x.astype(f32) @ w_t.astype(f32) + b.astype(f32)
    mean = jnp.mean(y, axis=-1, keepdims=True)
    var = jnp.mean((y - mean) ** 2, axis=-1, keepdims=True)
    yn = (y - mean) / jnp.sqrt(var + eps)
    yn = yn * gamma.astype(f32) + beta.astype(f32)
    return jnp.maximum(yn, 0.0)


def _make_case(key, B, d_in, d_out, dtype=jnp.float32):
    k1, k2, k3, key = jax.random.split(key, 4)
    bound = 1.0 / math.sqrt(d_in)
    x = jax.random.normal(k1, (B, d_in), dtype=jnp.float32).astype(dtype)
    w_t = jax.random.uniform(k2, (d_in, d_out), minval=-bound, maxval=bound,
                             dtype=jnp.float32).astype(dtype)
    b = jax.random.uniform(k3, (1, d_out), minval=-bound, maxval=bound,
                           dtype=jnp.float32).astype(dtype)
    gamma = jnp.ones((1, d_out), dtype)
    beta = jnp.zeros((1, d_out), dtype)
    return key, x, w_t, b, gamma, beta


if __name__ == "__main__":
    key = jax.random.PRNGKey(0)

    # ---- Case 1: aligned shapes, weight-resident path, 2 parallel batch tiles ----
    key, x, w_t, b, gamma, beta = _make_case(key, 512, 256, 128)
    params = prepare_mlp_params(w_t, b, gamma, beta)        # one-time prep (hoisted)
    out = jax.block_until_ready(mlp_block(x, params))
    ref = _reference(x, w_t, b, gamma, beta)
    assert out.shape == (512, 128)
    assert jnp.allclose(out, ref, atol=1e-4, rtol=1e-4), "f32 resident case mismatch"

    # ---- Case 2: small ragged shapes (batch / d_in / d_out padding) ----
    key, x2, w2, b2, g2, be2 = _make_case(key, 16, 48, 72)
    params2 = prepare_mlp_params(w2, b2, g2, be2)
    out2 = jax.block_until_ready(mlp_block(x2, params2))
    ref2 = _reference(x2, w2, b2, g2, be2)
    assert out2.shape == (16, 72)
    assert jnp.allclose(out2, ref2, atol=1e-4, rtol=1e-4), "ragged case mismatch"

    # ---- Case 3: bf16 operands (MXU-native fast path, f32 accumulation) ----
    xb = x.astype(jnp.bfloat16)
    params_b = prepare_mlp_params(w_t.astype(jnp.bfloat16), b.astype(jnp.bfloat16),
                                  gamma.astype(jnp.bfloat16),
                                  beta.astype(jnp.bfloat16))
    outb = jax.block_until_ready(mlp_block(xb, params_b))
    assert outb.dtype == jnp.bfloat16
    assert jnp.allclose(outb.astype(jnp.float32), ref, atol=3e-2, rtol=3e-2), \
        "bf16 case mismatch"

    # ---- Case 4: force the K-tiled accumulator path (serpentine K, bias-init) ----
    key, x4, w4, b4, g4, be4 = _make_case(key, 512, 1024, 256)
    params4 = prepare_mlp_params(w4, b4, g4, be4)
    out4 = jax.block_until_ready(mlp_block(x4, params4, force_path="ktiled"))
    ref4 = _reference(x4, w4, b4, g4, be4)
    assert out4.shape == (512, 256)
    assert jnp.allclose(out4, ref4, atol=5e-4, rtol=5e-4), "ktiled case mismatch"

    print("KERNEL_OK")
</pallas_src>

<mosaic_0001>
module attributes {stable_mosaic.version = 11 : i64} {
  func.func @_mlp_kernel_resident(%arg0: i32, %arg1: memref<256x256xf32, #tpu.memory_space<vmem>>, %arg2: memref<256x128xf32, #tpu.memory_space<vmem>>, %arg3: memref<1x128xf32, #tpu.memory_space<vmem>>, %arg4: memref<1x128xf32, #tpu.memory_space<vmem>>, %arg5: memref<1x128xf32, #tpu.memory_space<vmem>>, %arg6: memref<256x128xf32, #tpu.memory_space<vmem>>) attributes {dimension_semantics = [#tpu.dimension_semantics<parallel>], iteration_bounds = array<i64: 2>, scalar_prefetch = 0 : i64, scratch_operands = 0 : i64, tpu.core_type = #tpu.core_type<tc>, window_params = [{transform_indices = @transform_0, window_bounds = array<i64: 256, 256>}, {pipeline_mode = #tpu.pipeline_mode<synchronous>, transform_indices = @transform_1, window_bounds = array<i64: 256, 128>}, {pipeline_mode = #tpu.pipeline_mode<synchronous>, transform_indices = @transform_2, window_bounds = array<i64: 1, 128>}, {pipeline_mode = #tpu.pipeline_mode<synchronous>, transform_indices = @transform_3, window_bounds = array<i64: 1, 128>}, {pipeline_mode = #tpu.pipeline_mode<synchronous>, transform_indices = @transform_4, window_bounds = array<i64: 1, 128>}, {transform_indices = @transform_5, window_bounds = array<i64: 256, 128>}]} {
    %c0 = arith.constant 0 : index
    %c0_0 = arith.constant 0 : index
    %0 = vector.load %arg1[%c0, %c0_0] : memref<256x256xf32, #tpu.memory_space<vmem>>, vector<256x256xf32>
    %c0_1 = arith.constant 0 : index
    %c0_2 = arith.constant 0 : index
    %1 = vector.load %arg2[%c0_1, %c0_2] : memref<256x128xf32, #tpu.memory_space<vmem>>, vector<256x128xf32>
    %cst = arith.constant dense<0.000000e+00> : vector<256x128xf32>
    %2 = tpu.matmul %0, %1, %cst {dimension_numbers = #tpu.dot_dimension_numbers<[1], [0], [0], [1], [0, 0, 1, 1], [], []>} : vector<256x256xf32>, vector<256x128xf32>, vector<256x128xf32> -> vector<256x128xf32>
    %c0_3 = arith.constant 0 : index
    %c0_4 = arith.constant 0 : index
    %3 = vector.load %arg3[%c0_3, %c0_4] : memref<1x128xf32, #tpu.memory_space<vmem>>, vector<1x128xf32>
    %4 = vector.broadcast %3 : vector<1x128xf32> to vector<256x128xf32>
    %5 = arith.addf %2, %4 : vector<256x128xf32>
    %cst_5 = arith.constant dense<0.000000e+00> : vector<256xf32>
    %6 = vector.multi_reduction <add>, %5, %cst_5 [1] : vector<256x128xf32> to vector<256xf32>
    %7 = vector.shape_cast %6 : vector<256xf32> to vector<256x1xf32>
    %cst_6 = arith.constant 7.812500e-03 : f32
    %8 = vector.broadcast %cst_6 : f32 to vector<256x1xf32>
    %9 = arith.mulf %7, %8 : vector<256x1xf32>
    %10 = vector.broadcast %9 : vector<256x1xf32> to vector<256x128xf32>
    %11 = arith.subf %5, %10 : vector<256x128xf32>
    %12 = arith.mulf %11, %11 : vector<256x128xf32>
    %cst_7 = arith.constant dense<0.000000e+00> : vector<256xf32>
    %13 = vector.multi_reduction <add>, %12, %cst_7 [1] : vector<256x128xf32> to vector<256xf32>
    %14 = vector.shape_cast %13 : vector<256xf32> to vector<256x1xf32>
    %cst_8 = arith.constant 7.812500e-03 : f32
    %15 = vector.broadcast %cst_8 : f32 to vector<256x1xf32>
    %16 = arith.mulf %14, %15 : vector<256x1xf32>
    %cst_9 = arith.constant 9.99999974E-6 : f32
    %17 = vector.broadcast %cst_9 : f32 to vector<256x1xf32>
    %18 = arith.addf %16, %17 : vector<256x1xf32>
    %19 = math.rsqrt %18 : vector<256x1xf32>
    %20 = vector.broadcast %19 : vector<256x1xf32> to vector<256x128xf32>
    %21 = arith.mulf %11, %20 : vector<256x128xf32>
    %c0_10 = arith.constant 0 : index
    %c0_11 = arith.constant 0 : index
    %22 = vector.load %arg4[%c0_10, %c0_11] : memref<1x128xf32, #tpu.memory_space<vmem>>, vector<1x128xf32>
    %23 = vector.broadcast %22 : vector<1x128xf32> to vector<256x128xf32>
    %24 = arith.mulf %21, %23 : vector<256x128xf32>
    %c0_12 = arith.constant 0 : index
    %c0_13 = arith.constant 0 : index
    %25 = vector.load %arg5[%c0_12, %c0_13] : memref<1x128xf32, #tpu.memory_space<vmem>>, vector<1x128xf32>
    %26 = vector.broadcast %25 : vector<1x128xf32> to vector<256x128xf32>
    %27 = arith.addf %24, %26 : vector<256x128xf32>
    %cst_14 = arith.constant 0.000000e+00 : f32
    %28 = vector.broadcast %cst_14 : f32 to vector<256x128xf32>
    %29 = arith.maximumf %27, %28 : vector<256x128xf32>
    %c0_15 = arith.constant 0 : index
    %c0_16 = arith.constant 0 : index
    %30 = vector.load %arg6[%c0_15, %c0_16] : memref<256x128xf32, #tpu.memory_space<vmem>>, vector<256x128xf32>
    tpu.vector_store %arg6[%c0_15, %c0_16], %29 {strides = array<i32>} : memref<256x128xf32, #tpu.memory_space<vmem>>, vector<256x128xf32>,
    return
  }
  func.func @transform_0(%arg0: i32) -> (i32, i32) {
    %c0_i32 = arith.constant 0 : i32
    %c0_i32_0 = arith.constant 0 : i32
    return %arg0, %c0_i32 : i32, i32
  }
  func.func @transform_1(%arg0: i32) -> (i32, i32) {
    %c0_i32 = arith.constant 0 : i32
    %c0_i32_0 = arith.constant 0 : i32
    %c0_i32_1 = arith.constant 0 : i32
    return %c0_i32, %c0_i32_0 : i32, i32
  }
  func.func @transform_2(%arg0: i32) -> (i32, i32) {
    %c0_i32 = arith.constant 0 : i32
    %c0_i32_0 = arith.constant 0 : i32
    %c0_i32_1 = arith.constant 0 : i32
    return %c0_i32, %c0_i32_0 : i32, i32
  }
  func.func @transform_3(%arg0: i32) -> (i32, i32) {
    %c0_i32 = arith.constant 0 : i32
    %c0_i32_0 = arith.constant 0 : i32
    %c0_i32_1 = arith.constant 0 : i32
    return %c0_i32, %c0_i32_0 : i32, i32
  }
  func.func @transform_4(%arg0: i32) -> (i32, i32) {
    %c0_i32 = arith.constant 0 : i32
    %c0_i32_0 = arith.constant 0 : i32
    %c0_i32_1 = arith.constant 0 : i32
    return %c0_i32, %c0_i32_0 : i32, i32
  }
  func.func @transform_5(%arg0: i32) -> (i32, i32) {
    %c0_i32 = arith.constant 0 : i32
    %c0_i32_0 = arith.constant 0 : i32
    return %arg0, %c0_i32 : i32, i32
  }
}

</mosaic_0001>

<llo_original>
// kernel: _mlp_block_impl.1
$region0: #{_mlp_block_impl.1}
  #allocation0 [shape = 'u32[]', space=smem, size = 0x4, offset = 0x4, fixed_abs, tag = 'smem constant byte address 0x4 - core index']
  #allocation1 [shape = 'u32[72,128]{1,0:T(1,128)}', space=vmem, size = 0x9000, scoped, tag = 'internal scratch']
  %s0 = inlined_call_operand.hbm [shape: f32[512,256], index: 0, kind: input, shape index: {}]
  %s1 = inlined_call_operand.hbm [shape: f32[256,128], index: 1, kind: input, shape index: {}]
  %s2 = inlined_call_operand.vmem [shape: f32[1,128], index: 2, kind: input, shape index: {}]
  %s3 = inlined_call_operand.vmem [shape: f32[1,128], index: 3, kind: input, shape index: {}]
  %s4 = inlined_call_operand.vmem [shape: f32[1,128], index: 4, kind: input, shape index: {}]
  %s5 = inlined_call_operand.hbm [shape: f32[512,128], index: 5, kind: output, shape index: {}]
  %s6 = sld [smem:[#allocation0]]
  $region61: #{_mlp_block_impl.1} parent=0
    _
  %s8 = ssub.s32 1, %s6
  %s9 = scalar_select 0, %s8, %s6
  $region1: #{_mlp_block_impl.1} parent=0
    #allocation2 [shape = 'u8[524288]{0}', space=vmem, size = 0x80000, scoped, tag = 'input window, operand 0']
    #allocation3 [shape = 's32[2]{0}', space=sflag, size = 0x8, scoped, tag = 'scoped memory for _mlp_block_impl.1']
    #allocation4 [shape = 's32[2]{0}', space=sflag, size = 0x8, scoped, tag = 'scoped memory for _mlp_block_impl.1']
    #allocation5 [shape = 'u8[131072]{0}', space=vmem, size = 0x20000, scoped, tag = 'input window, operand 1, single buffered']
    #allocation6 [shape = 's32[1]{0}', space=sflag, size = 0x4, scoped, tag = 'scoped memory for _mlp_block_impl.1']
    #allocation7 [shape = 'u8[262144]{0}', space=vmem, size = 0x40000, scoped, tag = 'output window, operand 0']
    %10 = vsyncpa [#allocation3], 0
    %s11 = scalar_lea.sflag [#allocation3], 1
    %12 = vsyncpa %s11, 0
    %13 = vsyncpa [#allocation6], 0
    %14 = vsyncpa [#allocation4], 0
    %s15 = scalar_lea.sflag [#allocation4], 1
    %16 = vsyncpa %s15, 0
    loop: start=0, step=1, limit=4
    $region2: #{_mlp_block_impl.1} parent=1 // loop_pre_header
      _
    $region3: #{_mlp_block_impl.1} parent=1 // loop_header
      %s18 = sphi 0, %s22
      %p19 = scmp.ge.s32.totalorder %s18, 4
      %s28 = sphi 0, %s30
      %s31 = sphi 0, %s28
      %s32 = sphi 0, %s31
      %s48 = sphi 0, %s32
      %s52 = sphi 0, %s52
      %s54 = sphi 0, %s52
      %s55 = sphi 0, %s54
      %s69 = sphi 0, %s55
      %s73 = sphi 0, %s73
      %s75 = sphi 0, %s73
      %s76 = sphi 0, %s75
      %s90 = sphi 0, %s76
      %s94 = sphi 0, %s94
      %s96 = sphi 0, %s94
      %s97 = sphi 0, %s96
      %s111 = sphi 0, %s97
      %s115 = sphi 0, %s115
      %s117 = sphi 0, %s115
      %s118 = sphi 0, %s117
      %s132 = sphi 0, %s118
      %s138 = sphi 0, %s140
      %s141 = sphi 0, %s138
      %s142 = sphi 0, %s141
      %s158 = sphi 0, %s142
    $region4: #{_mlp_block_impl.1} parent=1 // loop_header_branch
      %21 = sbr.rel (%p19) target = $region8
    $region5: #{_mlp_block_impl.1} parent=1 // loop_body
      %s23 = ssub.s32 %s18, 1
      %s24 = ssub.s32 %s18, 2
      %s25 = sadd.s32 %s18, 1
      %s26 = ssub.s32 %s18, %s25
      %p27 = scmp.eq.s32.totalorder %s26, 0
      %s29 = sadd.s32 %s28, 1
      %s30 = scalar_select %p27, %s28, %s29
      %p33 = pneg %p27
      %p34 = scmp.eq.s32.totalorder %s18, 1
      %p35 = por %p33, %p34
      %p36 = scmp.ne.s32.totalorder %s28, %s31
      %p37 = scmp.eq.s32.totalorder %s18, 0
      %p38 = por %p36, %p37
      %p39 = scmp.ne.s32.totalorder %s28, %s31
      %p40 = scmp.eq.s32.totalorder %s23, 1
      %p41 = por %p39, %p40
      %p42 = scmp.ne.s32.totalorder %s31, %s32
      %p43 = scmp.eq.s32.totalorder %s23, 0
      %p44 = por %p42, %p43
      %p45 = scmp.ne.s32.totalorder %s31, %s32
      %p46 = scmp.eq.s32.totalorder %s24, 1
      %p47 = por %p45, %p46
      %p49 = scmp.ne.s32.totalorder %s32, %s48
      %p50 = scmp.eq.s32.totalorder %s24, 0
      %p51 = por %p49, %p50
      %s53 = sadd.s32 %s52, 1
      %p56 = scmp.eq.s32.totalorder %s18, 1
      %p57 = scmp.ne.s32.totalorder %s52, %s54
      %p58 = scmp.eq.s32.totalorder %s18, 0
      %p59 = por %p57, %p58
      %p60 = scmp.ne.s32.totalorder %s52, %s54
      %p61 = scmp.eq.s32.totalorder %s23, 1
      %p62 = por %p60, %p61
      %p63 = scmp.ne.s32.totalorder %s54, %s55
      %p64 = scmp.eq.s32.totalorder %s23, 0
      %p65 = por %p63, %p64
      %p66 = scmp.ne.s32.totalorder %s54, %s55
      %p67 = scmp.eq.s32.totalorder %s24, 1
      %p68 = por %p66, %p67
      %p70 = scmp.ne.s32.totalorder %s55, %s69
      %p71 = scmp.eq.s32.totalorder %s24, 0
      %p72 = por %p70, %p71
      %s74 = sadd.s32 %s73, 1
      %p77 = scmp.eq.s32.totalorder %s18, 1
      %p78 = scmp.ne.s32.totalorder %s73, %s75
      %p79 = scmp.eq.s32.totalorder %s18, 0
      %p80 = por %p78, %p79
      %p81 = scmp.ne.s32.totalorder %s73, %s75
      %p82 = scmp.eq.s32.totalorder %s23, 1
      %p83 = por %p81, %p82
      %p84 = scmp.ne.s32.totalorder %s75, %s76
      %p85 = scmp.eq.s32.totalorder %s23, 0
      %p86 = por %p84, %p85
      %p87 = scmp.ne.s32.totalorder %s75, %s76
      %p88 = scmp.eq.s32.totalorder %s24, 1
      %p89 = por %p87, %p88
      %p91 = scmp.ne.s32.totalorder %s76, %s90
      %p92 = scmp.eq.s32.totalorder %s24, 0
      %p93 = por %p91, %p92
      %s95 = sadd.s32 %s94, 1
      %p98 = scmp.eq.s32.totalorder %s18, 1
      %p99 = scmp.ne.s32.totalorder %s94, %s96
      %p100 = scmp.eq.s32.totalorder %s18, 0
      %p101 = por %p99, %p100
      %p102 = scmp.ne.s32.totalorder %s94, %s96
      %p103 = scmp.eq.s32.totalorder %s23, 1
      %p104 = por %p102, %p103
      %p105 = scmp.ne.s32.totalorder %s96, %s97
      %p106 = scmp.eq.s32.totalorder %s23, 0
      %p107 = por %p105, %p106
      %p108 = scmp.ne.s32.totalorder %s96, %s97
      %p109 = scmp.eq.s32.totalorder %s24, 1
      %p110 = por %p108, %p109
      %p112 = scmp.ne.s32.totalorder %s97, %s111
      %p113 = scmp.eq.s32.totalorder %s24, 0
      %p114 = por %p112, %p113
      %s116 = sadd.s32 %s115, 1
      %p119 = scmp.eq.s32.totalorder %s18, 1
      %p120 = scmp.ne.s32.totalorder %s115, %s117
      %p121 = scmp.eq.s32.totalorder %s18, 0
      %p122 = por %p120, %p121
      %p123 = scmp.ne.s32.totalorder %s115, %s117
      %p124 = scmp.eq.s32.totalorder %s23, 1
      %p125 = por %p123, %p124
      %p126 = scmp.ne.s32.totalorder %s117, %s118
      %p127 = scmp.eq.s32.totalorder %s23, 0
      %p128 = por %p126, %p127
      %p129 = scmp.ne.s32.totalorder %s117, %s118
      %p130 = scmp.eq.s32.totalorder %s24, 1
      %p131 = por %p129, %p130
      %p133 = scmp.ne.s32.totalorder %s118, %s132
      %p134 = scmp.eq.s32.totalorder %s24, 0
      %p135 = por %p133, %p134
      %s136 = ssub.s32 %s18, %s25
      %p137 = scmp.eq.s32.totalorder %s136, 0
      %s139 = sadd.s32 %s138, 1
      %s140 = scalar_select %p137, %s138, %s139
      %p143 = pneg %p137
      %p144 = scmp.eq.s32.totalorder %s18, 1
      %p145 = por %p143, %p144
      %p146 = scmp.ne.s32.totalorder %s138, %s141
      %p147 = scmp.eq.s32.totalorder %s18, 0
      %p148 = por %p146, %p147
      %p149 = scmp.ne.s32.totalorder %s138, %s141
      %p150 = scmp.eq.s32.totalorder %s23, 1
      %p151 = por %p149, %p150
      %p152 = scmp.ne.s32.totalorder %s141, %s142
      %p153 = scmp.eq.s32.totalorder %s23, 0
      %p154 = por %p152, %p153
      %p155 = scmp.ne.s32.totalorder %s141, %s142
      %p156 = scmp.eq.s32.totalorder %s24, 1
      %p157 = por %p155, %p156
      %p159 = scmp.ne.s32.totalorder %s142, %s158
      %p160 = scmp.eq.s32.totalorder %s24, 0
      %p161 = por %p159, %p160
      %p162 = scmp.le.s32.totalorder 1, %s18
      %p163 = scmp.lt.s32.totalorder %s18, 3
      %p164 = pnand %p162, %p163
      %p165 = pneg %p164
      // Predicated region
      $region9: #{_mlp_block_impl.1} parent=5 // pred_check
        _
      $region10: #{_mlp_block_impl.1} parent=5 // pred_check_branch
        %167 = sbr.rel (%p164) target = $region12
      $region11: #{_mlp_block_impl.1} parent=5 // pred_region
        %s168 = ssub.s32 %s18, 1
        // Predicated region
        $region13: #{_mlp_block_impl.1} parent=11 // pred_check
          %p169 = pneg %p65
        $region14: #{_mlp_block_impl.1} parent=11 // pred_check_branch
          %171 = sbr.rel (%p169) target = $region16
        $region15: #{_mlp_block_impl.1} parent=11 // pred_region
          %173 = vsyncadd [#allocation6], 0
          %s174 = sshll.u32 %s1, 4
          %s175 = int_to_ptr.hbm [resolvable:$true] %s174
          %s176 = sshll.u32 [#allocation5], 4
          %s177 = int_to_ptr.vmem [resolvable:$true] %s176
          %182 = dma.hbm_to_vmem [thread:$0]  %s175, 4096, %s177, [#allocation6], 128, 128, 8
        $region16: #{_mlp_block_impl.1} parent=11 // pred_fallthru
          _
        // Predicated region
        $region17: #{_mlp_block_impl.1} parent=11 // pred_check
          %p183 = pneg %p86
        $region18: #{_mlp_block_impl.1} parent=11 // pred_check_branch
          %185 = sbr.rel (%p183) target = $region20
        $region19: #{_mlp_block_impl.1} parent=11 // pred_region
          _
        $region20: #{_mlp_block_impl.1} parent=11 // pred_fallthru
          _
        // Predicated region
        $region21: #{_mlp_block_impl.1} parent=11 // pred_check
          %p186 = pneg %p107
        $region22: #{_mlp_block_impl.1} parent=11 // pred_check_branch
          %188 = sbr.rel (%p186) target = $region24
        $region23: #{_mlp_block_impl.1} parent=11 // pred_region
          _
        $region24: #{_mlp_block_impl.1} parent=11 // pred_fallthru
          _
        // Predicated region
        $region25: #{_mlp_block_impl.1} parent=11 // pred_check
          %p189 = pneg %p128
        $region26: #{_mlp_block_impl.1} parent=11 // pred_check_branch
          %191 = sbr.rel (%p189) target = $region28
        $region27: #{_mlp_block_impl.1} parent=11 // pred_region
          _
        $region28: #{_mlp_block_impl.1} parent=11 // pred_fallthru
          _
      $region12: #{_mlp_block_impl.1} parent=5 // pred_fallthru
        _
      %p192 = scmp.lt.s32.totalorder %s18, 2
      // Predicated region
      $region29: #{_mlp_block_impl.1} parent=5 // pred_check
        %p193 = pneg %p192
      $region30: #{_mlp_block_impl.1} parent=5 // pred_check_branch
        %195 = sbr.rel (%p193) target = $region32
      $region31: #{_mlp_block_impl.1} parent=5 // pred_region
        // Predicated region
        $region33: #{_mlp_block_impl.1} parent=31 // pred_check
          %p196 = pneg %p38
        $region34: #{_mlp_block_impl.1} parent=31 // pred_check_branch
          %198 = sbr.rel (%p196) target = $region36
        $region35: #{_mlp_block_impl.1} parent=31 // pred_region
          %s199 = sand.u32 %s28, 1
          %s200 = scalar_lea.sflag [#allocation3], %s199
          %s201 = sand.u32 %s28, 1
          %s202 = smul.addr %s201, 512
          %s203 = scalar_lea.vmem [#allocation2], %s202
          %s204 = smul.u32 32, %s18
          %206 = vsyncadd %s200, 0
          %s207 = smul.addr %s204, 2
          %s208 = smul.addr %s207, 8
          %s209 = scalar_lea.hbm %s0, %s208
          %s210 = sshll.u32 %s209, 4
          %s211 = int_to_ptr.hbm [resolvable:$true] %s210
          %s212 = sshll.u32 %s203, 4
          %s213 = int_to_ptr.vmem [resolvable:$true] %s212
          %218 = dma.hbm_to_vmem [thread:$0]  %s211, 8192, %s213, %s200, 256, 256, 16
        $region36: #{_mlp_block_impl.1} parent=31 // pred_fallthru
          _
      $region32: #{_mlp_block_impl.1} parent=5 // pred_fallthru
        _
      %p219 = scmp.le.s32.totalorder 1, %s18
      %p220 = scmp.lt.s32.totalorder %s18, 3
      %p221 = pnand %p219, %p220
      %p222 = pneg %p221
      // Predicated region
      $region37: #{_mlp_block_impl.1} parent=5 // pred_check
        _
      $region38: #{_mlp_block_impl.1} parent=5 // pred_check_branch
        %224 = sbr.rel (%p221) target = $region40
      $region39: #{_mlp_block_impl.1} parent=5 // pred_region
        %s225 = ssub.s32 %s18, 1
        %s226 = sand.u32 %s31, 1
        %s227 = scalar_lea.sflag [#allocation3], %s226
        %s228 = sand.u32 %s31, 1
        %s229 = smul.addr %s228, 512
        %s230 = scalar_lea.vmem [#allocation2], %s229
        // Predicated region
        $region41: #{_mlp_block_impl.1} parent=39 // pred_check
          %p231 = pneg %p44
        $region42: #{_mlp_block_impl.1} parent=39 // pred_check_branch
          %233 = sbr.rel (%p231) target = $region44
        $region43: #{_mlp_block_impl.1} parent=39 // pred_region
          %235 = dma.done %s227, 8192
        $region44: #{_mlp_block_impl.1} parent=39 // pred_fallthru
          _
        // Predicated region
        $region45: #{_mlp_block_impl.1} parent=39 // pred_check
          %p236 = pneg %p65
        $region46: #{_mlp_block_impl.1} parent=39 // pred_check_branch
          %238 = sbr.rel (%p236) target = $region48
        $region47: #{_mlp_block_impl.1} parent=39 // pred_region
          %240 = dma.done [#allocation6], 4096
        $region48: #{_mlp_block_impl.1} parent=39 // pred_fallthru
          _
        %s241 = sand.u32 %s31, 1
        %s242 = scalar_lea.sflag [#allocation3], %s241
        %s243 = sand.u32 %s31, 1
        %s244 = smul.addr %s243, 512
        %s245 = scalar_lea.vmem [#allocation2], %s244
        %p246 = pneg %p44
        %p247 = pneg %p41
        %p248 = pneg %p65
        %p249 = pneg %p62
        %p250 = pneg %p86
        %p251 = pneg %p83
        %p252 = pneg %p107
        %p253 = pneg %p104
        %p254 = pneg %p128
        %p255 = pneg %p125
        %p256 = pneg %p154
        %p257 = pneg %p151
        %s258 = sand.u32 %s141, 1
        %s259 = scalar_lea.sflag [#allocation4], %s258
        %s260 = sand.u32 %s141, 1
        %s261 = smul.addr %s260, 256
        %s262 = scalar_lea.vmem [#allocation7], %s261
        %s263 = smul.u32 32, %s23
        %s264 = smul.u32 32, %s23
        %v265 = vld [vmem:[%s230] sm:$0xff]
        %v266 = vld [vmem:[%s230 + $0x8] sm:$0xff]
        %v267 = vld [vmem:[%s230 + $0x10] sm:$0xff]
        %v268 = vld [vmem:[%s230 + $0x18] sm:$0xff]
        %v269 = vld [vmem:[%s230 + $0x20] sm:$0xff]
        %v270 = vld [vmem:[%s230 + $0x28] sm:$0xff]
        %v271 = vld [vmem:[%s230 + $0x30] sm:$0xff]
        %v272 = vld [vmem:[%s230 + $0x38] sm:$0xff]
        %v273 = vld [vmem:[%s230 + $0x40] sm:$0xff]
        %v274 = vld [vmem:[%s230 + $0x48] sm:$0xff]
        %v275 = vld [vmem:[%s230 + $0x50] sm:$0xff]
        %v276 = vld [vmem:[%s230 + $0x58] sm:$0xff]
        %v277 = vld [vmem:[%s230 + $0x60] sm:$0xff]
        %v278 = vld [vmem:[%s230 + $0x68] sm:$0xff]
        %v279 = vld [vmem:[%s230 + $0x70] sm:$0xff]
        %v280 = vld [vmem:[%s230 + $0x78] sm:$0xff]
        %v281 = vld [vmem:[%s230 + $0x80] sm:$0xff]
        %v282 = vld [vmem:[%s230 + $0x88] sm:$0xff]
        %v283 = vld [vmem:[%s230 + $0x90] sm:$0xff]
        %v284 = vld [vmem:[%s230 + $0x98] sm:$0xff]
        %v285 = vld [vmem:[%s230 + $0xa0] sm:$0xff]
        %v286 = vld [vmem:[%s230 + $0xa8] sm:$0xff]
        %v287 = vld [vmem:[%s230 + $0xb0] sm:$0xff]
        %v288 = vld [vmem:[%s230 + $0xb8] sm:$0xff]
        %v289 = vld [vmem:[%s230 + $0xc0] sm:$0xff]
        %v290 = vld [vmem:[%s230 + $0xc8] sm:$0xff]
        %v291 = vld [vmem:[%s230 + $0xd0] sm:$0xff]
        %v292 = vld [vmem:[%s230 + $0xd8] sm:$0xff]
        %v293 = vld [vmem:[%s230 + $0xe0] sm:$0xff]
        %v294 = vld [vmem:[%s230 + $0xe8] sm:$0xff]
        %v295 = vld [vmem:[%s230 + $0xf0] sm:$0xff]
        %v296 = vld [vmem:[%s230 + $0xf8] sm:$0xff]
        %v297 = vld [vmem:[%s230 + $0x100] sm:$0xff]
        %v298 = vld [vmem:[%s230 + $0x108] sm:$0xff]
        %v299 = vld [vmem:[%s230 + $0x110] sm:$0xff]
        %v300 = vld [vmem:[%s230 + $0x118] sm:$0xff]
        %v301 = vld [vmem:[%s230 + $0x120] sm:$0xff]
        %v302 = vld [vmem:[%s230 + $0x128] sm:$0xff]
        %v303 = vld [vmem:[%s230 + $0x130] sm:$0xff]
        %v304 = vld [vmem:[%s230 + $0x138] sm:$0xff]
        %v305 = vld [vmem:[%s230 + $0x140] sm:$0xff]
        %v306 = vld [vmem:[%s230 + $0x148] sm:$0xff]
        %v307 = vld [vmem:[%s230 + $0x150] sm:$0xff]
        %v308 = vld [vmem:[%s230 + $0x158] sm:$0xff]
        %v309 = vld [vmem:[%s230 + $0x160] sm:$0xff]
        %v310 = vld [vmem:[%s230 + $0x168] sm:$0xff]
        %v311 = vld [vmem:[%s230 + $0x170] sm:$0xff]
        %v312 = vld [vmem:[%s230 + $0x178] sm:$0xff]
        %v313 = vld [vmem:[%s230 + $0x180] sm:$0xff]
        %v314 = vld [vmem:[%s230 + $0x188] sm:$0xff]
        %v315 = vld [vmem:[%s230 + $0x190] sm:$0xff]
        %v316 = vld [vmem:[%s230 + $0x198] sm:$0xff]
        %v317 = vld [vmem:[%s230 + $0x1a0] sm:$0xff]
        %v318 = vld [vmem:[%s230 + $0x1a8] sm:$0xff]
        %v319 = vld [vmem:[%s230 + $0x1b0] sm:$0xff]
        %v320 = vld [vmem:[%s230 + $0x1b8] sm:$0xff]
        %v321 = vld [vmem:[%s230 + $0x1c0] sm:$0xff]
        %v322 = vld [vmem:[%s230 + $0x1c8] sm:$0xff]
        %v323 = vld [vmem:[%s230 + $0x1d0] sm:$0xff]
        %v324 = vld [vmem:[%s230 + $0x1d8] sm:$0xff]
        %v325 = vld [vmem:[%s230 + $0x1e0] sm:$0xff]
        %v326 = vld [vmem:[%s230 + $0x1e8] sm:$0xff]
        %v327 = vld [vmem:[%s230 + $0x1f0] sm:$0xff]
        %v328 = vld [vmem:[%s230 + $0x1f8] sm:$0xff]
        %v329 = vld [vmem:[#allocation5] sm:$0xff]
        %v330 = vld [vmem:[#allocation5 + $0x8] sm:$0xff]
        %v331 = vld [vmem:[#allocation5 + $0x10] sm:$0xff]
        %v332 = vld [vmem:[#allocation5 + $0x18] sm:$0xff]
        %v333 = vld [vmem:[#allocation5 + $0x20] sm:$0xff]
        %v334 = vld [vmem:[#allocation5 + $0x28] sm:$0xff]
        %v335 = vld [vmem:[#allocation5 + $0x30] sm:$0xff]
        %v336 = vld [vmem:[#allocation5 + $0x38] sm:$0xff]
        %v337 = vld [vmem:[#allocation5 + $0x40] sm:$0xff]
        %v338 = vld [vmem:[#allocation5 + $0x48] sm:$0xff]
        %v339 = vld [vmem:[#allocation5 + $0x50] sm:$0xff]
        %v340 = vld [vmem:[#allocation5 + $0x58] sm:$0xff]
        %v341 = vld [vmem:[#allocation5 + $0x60] sm:$0xff]
        %v342 = vld [vmem:[#allocation5 + $0x68] sm:$0xff]
        %v343 = vld [vmem:[#allocation5 + $0x70] sm:$0xff]
        %v344 = vld [vmem:[#allocation5 + $0x78] sm:$0xff]
        %v345 = vld [vmem:[#allocation5 + $0x80] sm:$0xff]
        %v346 = vld [vmem:[#allocation5 + $0x88] sm:$0xff]
        %v347 = vld [vmem:[#allocation5 + $0x90] sm:$0xff]
        %v348 = vld [vmem:[#allocation5 + $0x98] sm:$0xff]
        %v349 = vld [vmem:[#allocation5 + $0xa0] sm:$0xff]
        %v350 = vld [vmem:[#allocation5 + $0xa8] sm:$0xff]
        %v351 = vld [vmem:[#allocation5 + $0xb0] sm:$0xff]
        %v352 = vld [vmem:[#allocation5 + $0xb8] sm:$0xff]
        %v353 = vld [vmem:[#allocation5 + $0xc0] sm:$0xff]
        %v354 = vld [vmem:[#allocation5 + $0xc8] sm:$0xff]
        %v355 = vld [vmem:[#allocation5 + $0xd0] sm:$0xff]
        %v356 = vld [vmem:[#allocation5 + $0xd8] sm:$0xff]
        %v357 = vld [vmem:[#allocation5 + $0xe0] sm:$0xff]
        %v358 = vld [vmem:[#allocation5 + $0xe8] sm:$0xff]
        %v359 = vld [vmem:[#allocation5 + $0xf0] sm:$0xff]
        %v360 = vld [vmem:[#allocation5 + $0xf8] sm:$0xff]
        %v361 = vld [vmem:[%s2] sm:$0x1]
        %v363 = vperm.slane %v361, 0
        %365 = vmatpush.msra.mxu0 %v344
        %366 = vmatpush.msra.mxu0 %v343
        %367 = vmatpush.msra.mxu0 %v342
        %368 = vmatpush.msra.mxu0 %v341
        %369 = vmatpush.msra.mxu0 %v340
        %370 = vmatpush.msra.mxu0 %v339
        %371 = vmatpush.msra.mxu0 %v338
        %372 = vmatpush.msra.mxu0 %v337
        %373 = vmatpush.msra.mxu0 %v336
        %374 = vmatpush.msra.mxu0 %v335
        %375 = vmatpush.msra.mxu0 %v334
        %376 = vmatpush.msra.mxu0 %v333
        %377 = vmatpush.msra.mxu0 %v332
        %378 = vmatpush.msra.mxu0 %v331
        %379 = vmatpush.msra.mxu0 %v330
        %380 = vmatpush.msra.mxu0 %v329
        %381 = vmatmul.f32.gmra.mxu0 %v265
        %v382 = vpop.f32.mrf.mxu0
        %v383 = vadd.f32 %v363, %v382
        %384 = vmatmul.f32.gmra.mxu0 %v267
        %v385 = vpop.f32.mrf.mxu0
        %v386 = vadd.f32 %v363, %v385
        %387 = vmatmul.f32.gmra.mxu0 %v269
        %v388 = vpop.f32.mrf.mxu0
        %v389 = vadd.f32 %v363, %v388
        %390 = vmatmul.f32.gmra.mxu0 %v271
        %v391 = vpop.f32.mrf.mxu0
        %v392 = vadd.f32 %v363, %v391
        %393 = vmatmul.f32.gmra.mxu0 %v273
        %v394 = vpop.f32.mrf.mxu0
        %v395 = vadd.f32 %v363, %v394
        %396 = vmatmul.f32.gmra.mxu0 %v275
        %v397 = vpop.f32.mrf.mxu0
        %v398 = vadd.f32 %v363, %v397
        %399 = vmatmul.f32.gmra.mxu0 %v277
        %v400 = vpop.f32.mrf.mxu0
        %v401 = vadd.f32 %v363, %v400
        %402 = vmatmul.f32.gmra.mxu0 %v279
        %v403 = vpop.f32.mrf.mxu0
        %v404 = vadd.f32 %v363, %v403
        %405 = vmatmul.f32.gmra.mxu0 %v281
        %v406 = vpop.f32.mrf.mxu0
        %v407 = vadd.f32 %v363, %v406
        %408 = vmatmul.f32.gmra.mxu0 %v283
        %v409 = vpop.f32.mrf.mxu0
        %v410 = vadd.f32 %v363, %v409
        %411 = vmatmul.f32.gmra.mxu0 %v285
        %v412 = vpop.f32.mrf.mxu0
        %v413 = vadd.f32 %v363, %v412
        %414 = vmatmul.f32.gmra.mxu0 %v287
        %v415 = vpop.f32.mrf.mxu0
        %v416 = vadd.f32 %v363, %v415
        %417 = vmatmul.f32.gmra.mxu0 %v289
        %v418 = vpop.f32.mrf.mxu0
        %v419 = vadd.f32 %v363, %v418
        %420 = vmatmul.f32.gmra.mxu0 %v291
        %v421 = vpop.f32.mrf.mxu0
        %v422 = vadd.f32 %v363, %v421
        %423 = vmatmul.f32.gmra.mxu0 %v293
        %v424 = vpop.f32.mrf.mxu0
        %v425 = vadd.f32 %v363, %v424
        %426 = vmatmul.f32.gmra.mxu0 %v295
        %v427 = vpop.f32.mrf.mxu0
        %v428 = vadd.f32 %v363, %v427
        %429 = vmatmul.f32.gmra.mxu0 %v297
        %v430 = vpop.f32.mrf.mxu0
        %v431 = vadd.f32 %v363, %v430
        %432 = vmatmul.f32.gmra.mxu0 %v299
        %v433 = vpop.f32.mrf.mxu0
        %v434 = vadd.f32 %v363, %v433
        %435 = vmatmul.f32.gmra.mxu0 %v301
        %v436 = vpop.f32.mrf.mxu0
        %v437 = vadd.f32 %v363, %v436
        %438 = vmatmul.f32.gmra.mxu0 %v303
        %v439 = vpop.f32.mrf.mxu0
        %v440 = vadd.f32 %v363, %v439
        %441 = vmatmul.f32.gmra.mxu0 %v305
        %v442 = vpop.f32.mrf.mxu0
        %v443 = vadd.f32 %v363, %v442
        %444 = vmatmul.f32.gmra.mxu0 %v307
        %v445 = vpop.f32.mrf.mxu0
        %v446 = vadd.f32 %v363, %v445
        %447 = vmatmul.f32.gmra.mxu0 %v309
        %v448 = vpop.f32.mrf.mxu0
        %v449 = vadd.f32 %v363, %v448
        %450 = vmatmul.f32.gmra.mxu0 %v311
        %v451 = vpop.f32.mrf.mxu0
        %v452 = vadd.f32 %v363, %v451
        %453 = vmatmul.f32.gmra.mxu0 %v313
        %v454 = vpop.f32.mrf.mxu0
        %v455 = vadd.f32 %v363, %v454
        %456 = vmatmul.f32.gmra.mxu0 %v315
        %v457 = vpop.f32.mrf.mxu0
        %v458 = vadd.f32 %v363, %v457
        %459 = vmatmul.f32.gmra.mxu0 %v317
        %v460 = vpop.f32.mrf.mxu0
        %v461 = vadd.f32 %v363, %v460
        %462 = vmatmul.f32.gmra.mxu0 %v319
        %v463 = vpop.f32.mrf.mxu0
        %v464 = vadd.f32 %v363, %v463
        %465 = vmatmul.f32.gmra.mxu0 %v321
        %v466 = vpop.f32.mrf.mxu0
        %v467 = vadd.f32 %v363, %v466
        %468 = vmatmul.f32.gmra.mxu0 %v323
        %v469 = vpop.f32.mrf.mxu0
        %v470 = vadd.f32 %v363, %v469
        %471 = vmatmul.f32.gmra.mxu0 %v325
        %v472 = vpop.f32.mrf.mxu0
        %v473 = vadd.f32 %v363, %v472
        %474 = vmatmul.f32.gmra.mxu0 %v327
        %v475 = vpop.f32.mrf.mxu0
        %v476 = vadd.f32 %v363, %v475
        %477 = vdwg.mxu0
        %478 = vmatpush.msra.mxu0 %v360
        %479 = vmatpush.msra.mxu0 %v359
        %480 = vmatpush.msra.mxu0 %v358
        %481 = vmatpush.msra.mxu0 %v357
        %482 = vmatpush.msra.mxu0 %v356
        %483 = vmatpush.msra.mxu0 %v355
        %484 = vmatpush.msra.mxu0 %v354
        %485 = vmatpush.msra.mxu0 %v353
        %486 = vmatpush.msra.mxu0 %v352
        %487 = vmatpush.msra.mxu0 %v351
        %488 = vmatpush.msra.mxu0 %v350
        %489 = vmatpush.msra.mxu0 %v349
        %490 = vmatpush.msra.mxu0 %v348
        %491 = vmatpush.msra.mxu0 %v347
        %492 = vmatpush.msra.mxu0 %v346
        %493 = vmatpush.msra.mxu0 %v345
        %494 = vmatmul.f32.gmra.mxu0 %v266
        %v495 = vpop.f32.mrf.mxu0
        %v496 = vadd.f32 %v383, %v495
        %497 = vmatmul.f32.gmra.mxu0 %v268
        %v498 = vpop.f32.mrf.mxu0
        %v499 = vadd.f32 %v386, %v498
        %500 = vmatmul.f32.gmra.mxu0 %v270
        %v501 = vpop.f32.mrf.mxu0
        %v502 = vadd.f32 %v389, %v501
        %503 = vmatmul.f32.gmra.mxu0 %v272
        %v504 = vpop.f32.mrf.mxu0
        %v505 = vadd.f32 %v392, %v504
        %506 = vmatmul.f32.gmra.mxu0 %v274
        %v507 = vpop.f32.mrf.mxu0
        %v508 = vadd.f32 %v395, %v507
        %509 = vmatmul.f32.gmra.mxu0 %v276
        %v510 = vpop.f32.mrf.mxu0
        %v511 = vadd.f32 %v398, %v510
        %512 = vmatmul.f32.gmra.mxu0 %v278
        %v513 = vpop.f32.mrf.mxu0
        %v514 = vadd.f32 %v401, %v513
        %515 = vmatmul.f32.gmra.mxu0 %v280
        %v516 = vpop.f32.mrf.mxu0
        %v517 = vadd.f32 %v404, %v516
        %518 = vmatmul.f32.gmra.mxu0 %v282
        %v519 = vpop.f32.mrf.mxu0
        %v520 = vadd.f32 %v407, %v519
        %521 = vmatmul.f32.gmra.mxu0 %v284
        %v522 = vpop.f32.mrf.mxu0
        %v523 = vadd.f32 %v410, %v522
        %524 = vmatmul.f32.gmra.mxu0 %v286
        %v525 = vpop.f32.mrf.mxu0
        %v526 = vadd.f32 %v413, %v525
        %527 = vmatmul.f32.gmra.mxu0 %v288
        %v528 = vpop.f32.mrf.mxu0
        %v529 = vadd.f32 %v416, %v528
        %530 = vmatmul.f32.gmra.mxu0 %v290
        %v531 = vpop.f32.mrf.mxu0
        %v532 = vadd.f32 %v419, %v531
        %533 = vmatmul.f32.gmra.mxu0 %v292
        %v534 = vpop.f32.mrf.mxu0
        %v535 = vadd.f32 %v422, %v534
        %536 = vmatmul.f32.gmra.mxu0 %v294
        %v537 = vpop.f32.mrf.mxu0
        %v538 = vadd.f32 %v425, %v537
        %539 = vmatmul.f32.gmra.mxu0 %v296
        %v540 = vpop.f32.mrf.mxu0
        %v541 = vadd.f32 %v428, %v540
        %542 = vmatmul.f32.gmra.mxu0 %v298
        %v543 = vpop.f32.mrf.mxu0
        %v544 = vadd.f32 %v431, %v543
        %545 = vmatmul.f32.gmra.mxu0 %v300
        %v546 = vpop.f32.mrf.mxu0
        %v547 = vadd.f32 %v434, %v546
        %548 = vmatmul.f32.gmra.mxu0 %v302
        %v549 = vpop.f32.mrf.mxu0
        %v550 = vadd.f32 %v437, %v549
        %551 = vmatmul.f32.gmra.mxu0 %v304
        %v552 = vpop.f32.mrf.mxu0
        %v553 = vadd.f32 %v440, %v552
        %554 = vmatmul.f32.gmra.mxu0 %v306
        %v555 = vpop.f32.mrf.mxu0
        %v556 = vadd.f32 %v443, %v555
        %557 = vmatmul.f32.gmra.mxu0 %v308
        %v558 = vpop.f32.mrf.mxu0
        %v559 = vadd.f32 %v446, %v558
        %560 = vmatmul.f32.gmra.mxu0 %v310
        %v561 = vpop.f32.mrf.mxu0
        %v562 = vadd.f32 %v449, %v561
        %563 = vmatmul.f32.gmra.mxu0 %v312
        %v564 = vpop.f32.mrf.mxu0
        %v565 = vadd.f32 %v452, %v564
        %566 = vmatmul.f32.gmra.mxu0 %v314
        %v567 = vpop.f32.mrf.mxu0
        %v568 = vadd.f32 %v455, %v567
        %569 = vmatmul.f32.gmra.mxu0 %v316
        %v570 = vpop.f32.mrf.mxu0
        %v571 = vadd.f32 %v458, %v570
        %572 = vmatmul.f32.gmra.mxu0 %v318
        %v573 = vpop.f32.mrf.mxu0
        %v574 = vadd.f32 %v461, %v573
        %575 = vmatmul.f32.gmra.mxu0 %v320
        %v576 = vpop.f32.mrf.mxu0
        %v577 = vadd.f32 %v464, %v576
        %578 = vmatmul.f32.gmra.mxu0 %v322
        %v579 = vpop.f32.mrf.mxu0
        %v580 = vadd.f32 %v467, %v579
        %581 = vmatmul.f32.gmra.mxu0 %v324
        %v582 = vpop.f32.mrf.mxu0
        %v583 = vadd.f32 %v470, %v582
        %584 = vmatmul.f32.gmra.mxu0 %v326
        %v585 = vpop.f32.mrf.mxu0
        %v586 = vadd.f32 %v473, %v585
        %587 = vmatmul.f32.gmra.mxu0 %v328
        %v588 = vpop.f32.mrf.mxu0
        %v589 = vadd.f32 %v476, %v588
        %590 = vdwg.mxu0
        %591 = vadd.xlane.f32.xlu0 %v496
        %v592 = vpop.xlane.xlu0 %591
        %593 = vadd.xlane.f32.xlu0 %v499
        %v594 = vpop.xlane.xlu0 %593
        %595 = vadd.xlane.f32.xlu0 %v502
        %v596 = vpop.xlane.xlu0 %595
        %597 = vadd.xlane.f32.xlu0 %v505
        %v598 = vpop.xlane.xlu0 %597
        %599 = vadd.xlane.f32.xlu0 %v508
        %v600 = vpop.xlane.xlu0 %599
        %601 = vadd.xlane.f32.xlu0 %v511
        %v602 = vpop.xlane.xlu0 %601
        %603 = vadd.xlane.f32.xlu0 %v514
        %v604 = vpop.xlane.xlu0 %603
        %605 = vadd.xlane.f32.xlu0 %v517
        %v606 = vpop.xlane.xlu0 %605
        %607 = vadd.xlane.f32.xlu0 %v520
        %v608 = vpop.xlane.xlu0 %607
        %609 = vadd.xlane.f32.xlu0 %v523
        %v610 = vpop.xlane.xlu0 %609
        %611 = vadd.xlane.f32.xlu0 %v526
        %v612 = vpop.xlane.xlu0 %611
        %613 = vadd.xlane.f32.xlu0 %v529
        %v614 = vpop.xlane.xlu0 %613
        %615 = vadd.xlane.f32.xlu0 %v532
        %v616 = vpop.xlane.xlu0 %615
        %617 = vadd.xlane.f32.xlu0 %v535
        %v618 = vpop.xlane.xlu0 %617
        %619 = vadd.xlane.f32.xlu0 %v538
        %v620 = vpop.xlane.xlu0 %619
        %621 = vadd.xlane.f32.xlu0 %v541
        %v622 = vpop.xlane.xlu0 %621
        %623 = vadd.xlane.f32.xlu0 %v544
        %v624 = vpop.xlane.xlu0 %623
        %625 = vadd.xlane.f32.xlu0 %v547
        %v626 = vpop.xlane.xlu0 %625
        %627 = vadd.xlane.f32.xlu0 %v550
        %v628 = vpop.xlane.xlu0 %627
        %629 = vadd.xlane.f32.xlu0 %v553
        %v630 = vpop.xlane.xlu0 %629
        %631 = vadd.xlane.f32.xlu0 %v556
        %v632 = vpop.xlane.xlu0 %631
        %633 = vadd.xlane.f32.xlu0 %v559
        %v634 = vpop.xlane.xlu0 %633
        %635 = vadd.xlane.f32.xlu0 %v562
        %v636 = vpop.xlane.xlu0 %635
        %637 = vadd.xlane.f32.xlu0 %v565
        %v638 = vpop.xlane.xlu0 %637
        %639 = vadd.xlane.f32.xlu0 %v568
        %v640 = vpop.xlane.xlu0 %639
        %641 = vadd.xlane.f32.xlu0 %v571
        %v642 = vpop.xlane.xlu0 %641
        %643 = vadd.xlane.f32.xlu0 %v574
        %v644 = vpop.xlane.xlu0 %643
        %645 = vadd.xlane.f32.xlu0 %v577
        %v646 = vpop.xlane.xlu0 %645
        %647 = vadd.xlane.f32.xlu0 %v580
        %v648 = vpop.xlane.xlu0 %647
        %649 = vadd.xlane.f32.xlu0 %v583
        %v650 = vpop.xlane.xlu0 %649
        %651 = vadd.xlane.f32.xlu0 %v586
        %v652 = vpop.xlane.xlu0 %651
        %653 = vadd.xlane.f32.xlu0 %v589
        %v654 = vpop.xlane.xlu0 %653
        %v655 = vmul.f32 %v592, 0.0078125
        %v656 = vmul.f32 %v594, 0.0078125
        %v657 = vmul.f32 %v596, 0.0078125
        %v658 = vmul.f32 %v598, 0.0078125
        %v659 = vmul.f32 %v600, 0.0078125
        %v660 = vmul.f32 %v602, 0.0078125
        %v661 = vmul.f32 %v604, 0.0078125
        %v662 = vmul.f32 %v606, 0.0078125
        %v663 = vmul.f32 %v608, 0.0078125
        %v664 = vmul.f32 %v610, 0.0078125
        %v665 = vmul.f32 %v612, 0.0078125
        %v666 = vmul.f32 %v614, 0.0078125
        %v667 = vmul.f32 %v616, 0.0078125
        %v668 = vmul.f32 %v618, 0.0078125
        %v669 = vmul.f32 %v620, 0.0078125
        %v670 = vmul.f32 %v622, 0.0078125
        %v671 = vmul.f32 %v624, 0.0078125
        %v672 = vmul.f32 %v626, 0.0078125
        %v673 = vmul.f32 %v628, 0.0078125
        %v674 = vmul.f32 %v630, 0.0078125
        %v675 = vmul.f32 %v632, 0.0078125
        %v676 = vmul.f32 %v634, 0.0078125
        %v677 = vmul.f32 %v636, 0.0078125
        %v678 = vmul.f32 %v638, 0.0078125
        %v679 = vmul.f32 %v640, 0.0078125
        %v680 = vmul.f32 %v642, 0.0078125
        %v681 = vmul.f32 %v644, 0.0078125
        %v682 = vmul.f32 %v646, 0.0078125
        %v683 = vmul.f32 %v648, 0.0078125
        %v684 = vmul.f32 %v650, 0.0078125
        %v685 = vmul.f32 %v652, 0.0078125
        %v686 = vmul.f32 %v654, 0.0078125
        %v687 = vsub.f32 %v496, %v655
        %v688 = vsub.f32 %v499, %v656
        %v689 = vsub.f32 %v502, %v657
        %v690 = vsub.f32 %v505, %v658
        %v691 = vsub.f32 %v508, %v659
        %v692 = vsub.f32 %v511, %v660
        %v693 = vsub.f32 %v514, %v661
        %v694 = vsub.f32 %v517, %v662
        %v695 = vsub.f32 %v520, %v663
        %v696 = vsub.f32 %v523, %v664
        %v697 = vsub.f32 %v526, %v665
        %v698 = vsub.f32 %v529, %v666
        %v699 = vsub.f32 %v532, %v667
        %v700 = vsub.f32 %v535, %v668
        %v701 = vsub.f32 %v538, %v669
        %v702 = vsub.f32 %v541, %v670
        %v703 = vsub.f32 %v544, %v671
        %v704 = vsub.f32 %v547, %v672
        %v705 = vsub.f32 %v550, %v673
        %v706 = vsub.f32 %v553, %v674
        %v707 = vsub.f32 %v556, %v675
        %v708 = vsub.f32 %v559, %v676
        %v709 = vsub.f32 %v562, %v677
        %v710 = vsub.f32 %v565, %v678
        %v711 = vsub.f32 %v568, %v679
        %v712 = vsub.f32 %v571, %v680
        %v713 = vsub.f32 %v574, %v681
        %v714 = vsub.f32 %v577, %v682
        %v715 = vsub.f32 %v580, %v683
        %v716 = vsub.f32 %v583, %v684
        %v717 = vsub.f32 %v586, %v685
        %v718 = vsub.f32 %v589, %v686
        %v719 = vmul.f32 %v687, %v687
        %v720 = vmul.f32 %v688, %v688
        %v721 = vmul.f32 %v689, %v689
        %v722 = vmul.f32 %v690, %v690
        %v723 = vmul.f32 %v691, %v691
        %v724 = vmul.f32 %v692, %v692
        %v725 = vmul.f32 %v693, %v693
        %v726 = vmul.f32 %v694, %v694
        %v727 = vmul.f32 %v695, %v695
        %v728 = vmul.f32 %v696, %v696
        %v729 = vmul.f32 %v697, %v697
        %v730 = vmul.f32 %v698, %v698
        %v731 = vmul.f32 %v699, %v699
        %v732 = vmul.f32 %v700, %v700
        %v733 = vmul.f32 %v701, %v701
        %v734 = vmul.f32 %v702, %v702
        %v735 = vmul.f32 %v703, %v703
        %v736 = vmul.f32 %v704, %v704
        %v737 = vmul.f32 %v705, %v705
        %v738 = vmul.f32 %v706, %v706
        %v739 = vmul.f32 %v707, %v707
        %v740 = vmul.f32 %v708, %v708
        %v741 = vmul.f32 %v709, %v709
        %v742 = vmul.f32 %v710, %v710
        %v743 = vmul.f32 %v711, %v711
        %v744 = vmul.f32 %v712, %v712
        %v745 = vmul.f32 %v713, %v713
        %v746 = vmul.f32 %v714, %v714
        %v747 = vmul.f32 %v715, %v715
        %v748 = vmul.f32 %v716, %v716
        %v749 = vmul.f32 %v717, %v717
        %v750 = vmul.f32 %v718, %v718
        %751 = vadd.xlane.f32.xlu0 %v719
        %v752 = vpop.xlane.xlu0 %751
        %753 = vadd.xlane.f32.xlu0 %v720
        %v754 = vpop.xlane.xlu0 %753
        %755 = vadd.xlane.f32.xlu0 %v721
        %v756 = vpop.xlane.xlu0 %755
        %757 = vadd.xlane.f32.xlu0 %v722
        %v758 = vpop.xlane.xlu0 %757
        %759 = vadd.xlane.f32.xlu0 %v723
        %v760 = vpop.xlane.xlu0 %759
        %761 = vadd.xlane.f32.xlu0 %v724
        %v762 = vpop.xlane.xlu0 %761
        %763 = vadd.xlane.f32.xlu0 %v725
        %v764 = vpop.xlane.xlu0 %763
        %765 = vadd.xlane.f32.xlu0 %v726
        %v766 = vpop.xlane.xlu0 %765
        %767 = vadd.xlane.f32.xlu0 %v727
        %v768 = vpop.xlane.xlu0 %767
        %769 = vadd.xlane.f32.xlu0 %v728
        %v770 = vpop.xlane.xlu0 %769
        %771 = vadd.xlane.f32.xlu0 %v729
        %v772 = vpop.xlane.xlu0 %771
        %773 = vadd.xlane.f32.xlu0 %v730
        %v774 = vpop.xlane.xlu0 %773
        %775 = vadd.xlane.f32.xlu0 %v731
        %v776 = vpop.xlane.xlu0 %775
        %777 = vadd.xlane.f32.xlu0 %v732
        %v778 = vpop.xlane.xlu0 %777
        %779 = vadd.xlane.f32.xlu0 %v733
        %v780 = vpop.xlane.xlu0 %779
        %781 = vadd.xlane.f32.xlu0 %v734
        %v782 = vpop.xlane.xlu0 %781
        %783 = vadd.xlane.f32.xlu0 %v735
        %v784 = vpop.xlane.xlu0 %783
        %785 = vadd.xlane.f32.xlu0 %v736
        %v786 = vpop.xlane.xlu0 %785
        %787 = vadd.xlane.f32.xlu0 %v737
        %v788 = vpop.xlane.xlu0 %787
        %789 = vadd.xlane.f32.xlu0 %v738
        %v790 = vpop.xlane.xlu0 %789
        %791 = vadd.xlane.f32.xlu0 %v739
        %v792 = vpop.xlane.xlu0 %791
        %793 = vadd.xlane.f32.xlu0 %v740
        %v794 = vpop.xlane.xlu0 %793
        %795 = vadd.xlane.f32.xlu0 %v741
        %v796 = vpop.xlane.xlu0 %795
        %797 = vadd.xlane.f32.xlu0 %v742
        %v798 = vpop.xlane.xlu0 %797
        %799 = vadd.xlane.f32.xlu0 %v743
        %v800 = vpop.xlane.xlu0 %799
        %801 = vadd.xlane.f32.xlu0 %v744
        %v802 = vpop.xlane.xlu0 %801
        %803 = vadd.xlane.f32.xlu0 %v745
        %v804 = vpop.xlane.xlu0 %803
        %805 = vadd.xlane.f32.xlu0 %v746
        %v806 = vpop.xlane.xlu0 %805
        %807 = vadd.xlane.f32.xlu0 %v747
        %v808 = vpop.xlane.xlu0 %807
        %809 = vadd.xlane.f32.xlu0 %v748
        %v810 = vpop.xlane.xlu0 %809
        %811 = vadd.xlane.f32.xlu0 %v749
        %v812 = vpop.xlane.xlu0 %811
        %813 = vadd.xlane.f32.xlu0 %v750
        %v814 = vpop.xlane.xlu0 %813
        %v815 = vmul.f32 %v752, 0.0078125
        %v816 = vmul.f32 %v754, 0.0078125
        %v817 = vmul.f32 %v756, 0.0078125
        %v818 = vmul.f32 %v758, 0.0078125
        %v819 = vmul.f32 %v760, 0.0078125
        %v820 = vmul.f32 %v762, 0.0078125
        %v821 = vmul.f32 %v764, 0.0078125
        %v822 = vmul.f32 %v766, 0.0078125
        %v823 = vmul.f32 %v768, 0.0078125
        %v824 = vmul.f32 %v770, 0.0078125
        %v825 = vmul.f32 %v772, 0.0078125
        %v826 = vmul.f32 %v774, 0.0078125
        %v827 = vmul.f32 %v776, 0.0078125
        %v828 = vmul.f32 %v778, 0.0078125
        %v829 = vmul.f32 %v780, 0.0078125
        %v830 = vmul.f32 %v782, 0.0078125
        %v831 = vmul.f32 %v784, 0.0078125
        %v832 = vmul.f32 %v786, 0.0078125
        %v833 = vmul.f32 %v788, 0.0078125
        %v834 = vmul.f32 %v790, 0.0078125
        %v835 = vmul.f32 %v792, 0.0078125
        %v836 = vmul.f32 %v794, 0.0078125
        %v837 = vmul.f32 %v796, 0.0078125
        %v838 = vmul.f32 %v798, 0.0078125
        %v839 = vmul.f32 %v800, 0.0078125
        %v840 = vmul.f32 %v802, 0.0078125
        %v841 = vmul.f32 %v804, 0.0078125
        %v842 = vmul.f32 %v806, 0.0078125
        %v843 = vmul.f32 %v808, 0.0078125
        %v844 = vmul.f32 %v810, 0.0078125
        %v845 = vmul.f32 %v812, 0.0078125
        %v846 = vmul.f32 %v814, 0.0078125
        %v847 = vadd.f32 %v815, 1e-05
        %v848 = vadd.f32 %v816, 1e-05
        %v849 = vadd.f32 %v817, 1e-05
        %v850 = vadd.f32 %v818, 1e-05
        %v851 = vadd.f32 %v819, 1e-05
        %v852 = vadd.f32 %v820, 1e-05
        %v853 = vadd.f32 %v821, 1e-05
        %v854 = vadd.f32 %v822, 1e-05
        %v855 = vadd.f32 %v823, 1e-05
        %v856 = vadd.f32 %v824, 1e-05
        %v857 = vadd.f32 %v825, 1e-05
        %v858 = vadd.f32 %v826, 1e-05
        %v859 = vadd.f32 %v827, 1e-05
        %v860 = vadd.f32 %v828, 1e-05
        %v861 = vadd.f32 %v829, 1e-05
        %v862 = vadd.f32 %v830, 1e-05
        %v863 = vadd.f32 %v831, 1e-05
        %v864 = vadd.f32 %v832, 1e-05
        %v865 = vadd.f32 %v833, 1e-05
        %v866 = vadd.f32 %v834, 1e-05
        %v867 = vadd.f32 %v835, 1e-05
        %v868 = vadd.f32 %v836, 1e-05
        %v869 = vadd.f32 %v837, 1e-05
        %v870 = vadd.f32 %v838, 1e-05
        %v871 = vadd.f32 %v839, 1e-05
        %v872 = vadd.f32 %v840, 1e-05
        %v873 = vadd.f32 %v841, 1e-05
        %v874 = vadd.f32 %v842, 1e-05
        %v875 = vadd.f32 %v843, 1e-05
        %v876 = vadd.f32 %v844, 1e-05
        %v877 = vadd.f32 %v845, 1e-05
        %v878 = vadd.f32 %v846, 1e-05
        %v879 = vrsqrt.pop %v847
        %v880 = vmul.f32 %v879, %v847
        %v881 = vmul.f32 %v880, %v879
        %v882 = vmul.f32 0.5, %v881
        %v883 = vsub.f32 1.5, %v882
        %v884 = vmul.f32 %v879, %v883
        %vm885 = vweird.f32 %v847
        %vm886 = vweird.f32 %v879
        %vm887 = vmor %vm885, %vm886
        %v888 = vsel %vm887, %v879, %v884
        %v889 = vrsqrt.pop %v848
        %v890 = vmul.f32 %v889, %v848
        %v891 = vmul.f32 %v890, %v889
        %v892 = vmul.f32 0.5, %v891
        %v893 = vsub.f32 1.5, %v892
        %v894 = vmul.f32 %v889, %v893
        %vm895 = vweird.f32 %v848
        %vm896 = vweird.f32 %v889
        %vm897 = vmor %vm895, %vm896
        %v898 = vsel %vm897, %v889, %v894
        %v899 = vrsqrt.pop %v849
        %v900 = vmul.f32 %v899, %v849
        %v901 = vmul.f32 %v900, %v899
        %v902 = vmul.f32 0.5, %v901
        %v903 = vsub.f32 1.5, %v902
        %v904 = vmul.f32 %v899, %v903
        %vm905 = vweird.f32 %v849
        %vm906 = vweird.f32 %v899
        %vm907 = vmor %vm905, %vm906
        %v908 = vsel %vm907, %v899, %v904
        %v909 = vrsqrt.pop %v850
        %v910 = vmul.f32 %v909, %v850
        %v911 = vmul.f32 %v910, %v909
        %v912 = vmul.f32 0.5, %v911
        %v913 = vsub.f32 1.5, %v912
        %v914 = vmul.f32 %v909, %v913
        %vm915 = vweird.f32 %v850
        %vm916 = vweird.f32 %v909
        %vm917 = vmor %vm915, %vm916
        %v918 = vsel %vm917, %v909, %v914
        %v919 = vrsqrt.pop %v851
        %v920 = vmul.f32 %v919, %v851
        %v921 = vmul.f32 %v920, %v919
        %v922 = vmul.f32 0.5, %v921
        %v923 = vsub.f32 1.5, %v922
        %v924 = vmul.f32 %v919, %v923
        %vm925 = vweird.f32 %v851
        %vm926 = vweird.f32 %v919
        %vm927 = vmor %vm925, %vm926
        %v928 = vsel %vm927, %v919, %v924
        %v929 = vrsqrt.pop %v852
        %v930 = vmul.f32 %v929, %v852
        %v931 = vmul.f32 %v930, %v929
        %v932 = vmul.f32 0.5, %v931
        %v933 = vsub.f32 1.5, %v932
        %v934 = vmul.f32 %v929, %v933
        %vm935 = vweird.f32 %v852
        %vm936 = vweird.f32 %v929
        %vm937 = vmor %vm935, %vm936
        %v938 = vsel %vm937, %v929, %v934
        %v939 = vrsqrt.pop %v853
        %v940 = vmul.f32 %v939, %v853
        %v941 = vmul.f32 %v940, %v939
        %v942 = vmul.f32 0.5, %v941
        %v943 = vsub.f32 1.5, %v942
        %v944 = vmul.f32 %v939, %v943
        %vm945 = vweird.f32 %v853
        %vm946 = vweird.f32 %v939
        %vm947 = vmor %vm945, %vm946
        %v948 = vsel %vm947, %v939, %v944
        %v949 = vrsqrt.pop %v854
        %v950 = vmul.f32 %v949, %v854
        %v951 = vmul.f32 %v950, %v949
        %v952 = vmul.f32 0.5, %v951
        %v953 = vsub.f32 1.5, %v952
        %v954 = vmul.f32 %v949, %v953
        %vm955 = vweird.f32 %v854
        %vm956 = vweird.f32 %v949
        %vm957 = vmor %vm955, %vm956
        %v958 = vsel %vm957, %v949, %v954
        %v959 = vrsqrt.pop %v855
        %v960 = vmul.f32 %v959, %v855
        %v961 = vmul.f32 %v960, %v959
        %v962 = vmul.f32 0.5, %v961
        %v963 = vsub.f32 1.5, %v962
        %v964 = vmul.f32 %v959, %v963
        %vm965 = vweird.f32 %v855
        %vm966 = vweird.f32 %v959
        %vm967 = vmor %vm965, %vm966
        %v968 = vsel %vm967, %v959, %v964
        %v969 = vrsqrt.pop %v856
        %v970 = vmul.f32 %v969, %v856
        %v971 = vmul.f32 %v970, %v969
        %v972 = vmul.f32 0.5, %v971
        %v973 = vsub.f32 1.5, %v972
        %v974 = vmul.f32 %v969, %v973
        %vm975 = vweird.f32 %v856
        %vm976 = vweird.f32 %v969
        %vm977 = vmor %vm975, %vm976
        %v978 = vsel %vm977, %v969, %v974
        %v979 = vrsqrt.pop %v857
        %v980 = vmul.f32 %v979, %v857
        %v981 = vmul.f32 %v980, %v979
        %v982 = vmul.f32 0.5, %v981
        %v983 = vsub.f32 1.5, %v982
        %v984 = vmul.f32 %v979, %v983
        %vm985 = vweird.f32 %v857
        %vm986 = vweird.f32 %v979
        %vm987 = vmor %vm985, %vm986
        %v988 = vsel %vm987, %v979, %v984
        %v989 = vrsqrt.pop %v858
        %v990 = vmul.f32 %v989, %v858
        %v991 = vmul.f32 %v990, %v989
        %v992 = vmul.f32 0.5, %v991
        %v993 = vsub.f32 1.5, %v992
        %v994 = vmul.f32 %v989, %v993
        %vm995 = vweird.f32 %v858
        %vm996 = vweird.f32 %v989
        %vm997 = vmor %vm995, %vm996
        %v998 = vsel %vm997, %v989, %v994
        %v999 = vrsqrt.pop %v859
        %v1000 = vmul.f32 %v999, %v859
        %v1001 = vmul.f32 %v1000, %v999
        %v1002 = vmul.f32 0.5, %v1001
        %v1003 = vsub.f32 1.5, %v1002
        %v1004 = vmul.f32 %v999, %v1003
        %vm1005 = vweird.f32 %v859
        %vm1006 = vweird.f32 %v999
        %vm1007 = vmor %vm1005, %vm1006
        %v1008 = vsel %vm1007, %v999, %v1004
        %v1009 = vrsqrt.pop %v860
        %v1010 = vmul.f32 %v1009, %v860
        %v1011 = vmul.f32 %v1010, %v1009
        %v1012 = vmul.f32 0.5, %v1011
        %v1013 = vsub.f32 1.5, %v1012
        %v1014 = vmul.f32 %v1009, %v1013
        %vm1015 = vweird.f32 %v860
        %vm1016 = vweird.f32 %v1009
        %vm1017 = vmor %vm1015, %vm1016
        %v1018 = vsel %vm1017, %v1009, %v1014
        %v1019 = vrsqrt.pop %v861
        %v1020 = vmul.f32 %v1019, %v861
        %v1021 = vmul.f32 %v1020, %v1019
        %v1022 = vmul.f32 0.5, %v1021
        %v1023 = vsub.f32 1.5, %v1022
        %v1024 = vmul.f32 %v1019, %v1023
        %vm1025 = vweird.f32 %v861
        %vm1026 = vweird.f32 %v1019
        %vm1027 = vmor %vm1025, %vm1026
        %v1028 = vsel %vm1027, %v1019, %v1024
        %v1029 = vrsqrt.pop %v862
        %v1030 = vmul.f32 %v1029, %v862
        %v1031 = vmul.f32 %v1030, %v1029
        %v1032 = vmul.f32 0.5, %v1031
        %v1033 = vsub.f32 1.5, %v1032
        %v1034 = vmul.f32 %v1029, %v1033
        %vm1035 = vweird.f32 %v862
        %vm1036 = vweird.f32 %v1029
        %vm1037 = vmor %vm1035, %vm1036
        %v1038 = vsel %vm1037, %v1029, %v1034
        %v1039 = vrsqrt.pop %v863
        %v1040 = vmul.f32 %v1039, %v863
        %v1041 = vmul.f32 %v1040, %v1039
        %v1042 = vmul.f32 0.5, %v1041
        %v1043 = vsub.f32 1.5, %v1042
        %v1044 = vmul.f32 %v1039, %v1043
        %vm1045 = vweird.f32 %v863
        %vm1046 = vweird.f32 %v1039
        %vm1047 = vmor %vm1045, %vm1046
        %v1048 = vsel %vm1047, %v1039, %v1044
        %v1049 = vrsqrt.pop %v864
        %v1050 = vmul.f32 %v1049, %v864
        %v1051 = vmul.f32 %v1050, %v1049
        %v1052 = vmul.f32 0.5, %v1051
        %v1053 = vsub.f32 1.5, %v1052
        %v1054 = vmul.f32 %v1049, %v1053
        %vm1055 = vweird.f32 %v864
        %vm1056 = vweird.f32 %v1049
        %vm1057 = vmor %vm1055, %vm1056
        %v1058 = vsel %vm1057, %v1049, %v1054
        %v1059 = vrsqrt.pop %v865
        %v1060 = vmul.f32 %v1059, %v865
        %v1061 = vmul.f32 %v1060, %v1059
        %v1062 = vmul.f32 0.5, %v1061
        %v1063 = vsub.f32 1.5, %v1062
        %v1064 = vmul.f32 %v1059, %v1063
        %vm1065 = vweird.f32 %v865
        %vm1066 = vweird.f32 %v1059
        %vm1067 = vmor %vm1065, %vm1066
        %v1068 = vsel %vm1067, %v1059, %v1064
        %v1069 = vrsqrt.pop %v866
        %v1070 = vmul.f32 %v1069, %v866
        %v1071 = vmul.f32 %v1070, %v1069
        %v1072 = vmul.f32 0.5, %v1071
        %v1073 = vsub.f32 1.5, %v1072
        %v1074 = vmul.f32 %v1069, %v1073
        %vm1075 = vweird.f32 %v866
        %vm1076 = vweird.f32 %v1069
        %vm1077 = vmor %vm1075, %vm1076
        %v1078 = vsel %vm1077, %v1069, %v1074
        %v1079 = vrsqrt.pop %v867
        %v1080 = vmul.f32 %v1079, %v867
        %v1081 = vmul.f32 %v1080, %v1079
        %v1082 = vmul.f32 0.5, %v1081
        %v1083 = vsub.f32 1.5, %v1082
        %v1084 = vmul.f32 %v1079, %v1083
        %vm1085 = vweird.f32 %v867
        %vm1086 = vweird.f32 %v1079
        %vm1087 = vmor %vm1085, %vm1086
        %v1088 = vsel %vm1087, %v1079, %v1084
        %v1089 = vrsqrt.pop %v868
        %v1090 = vmul.f32 %v1089, %v868
        %v1091 = vmul.f32 %v1090, %v1089
        %v1092 = vmul.f32 0.5, %v1091
        %v1093 = vsub.f32 1.5, %v1092
        %v1094 = vmul.f32 %v1089, %v1093
        %vm1095 = vweird.f32 %v868
        %vm1096 = vweird.f32 %v1089
        %vm1097 = vmor %vm1095, %vm1096
        %v1098 = vsel %vm1097, %v1089, %v1094
        %v1099 = vrsqrt.pop %v869
        %v1100 = vmul.f32 %v1099, %v869
        %v1101 = vmul.f32 %v1100, %v1099
        %v1102 = vmul.f32 0.5, %v1101
        %v1103 = vsub.f32 1.5, %v1102
        %v1104 = vmul.f32 %v1099, %v1103
        %vm1105 = vweird.f32 %v869
        %vm1106 = vweird.f32 %v1099
        %vm1107 = vmor %vm1105, %vm1106
        %v1108 = vsel %vm1107, %v1099, %v1104
        %v1109 = vrsqrt.pop %v870
        %v1110 = vmul.f32 %v1109, %v870
        %v1111 = vmul.f32 %v1110, %v1109
        %v1112 = vmul.f32 0.5, %v1111
        %v1113 = vsub.f32 1.5, %v1112
        %v1114 = vmul.f32 %v1109, %v1113
        %vm1115 = vweird.f32 %v870
        %vm1116 = vweird.f32 %v1109
        %vm1117 = vmor %vm1115, %vm1116
        %v1118 = vsel %vm1117, %v1109, %v1114
        %v1119 = vrsqrt.pop %v871
        %v1120 = vmul.f32 %v1119, %v871
        %v1121 = vmul.f32 %v1120, %v1119
        %v1122 = vmul.f32 0.5, %v1121
        %v1123 = vsub.f32 1.5, %v1122
        %v1124 = vmul.f32 %v1119, %v1123
        %vm1125 = vweird.f32 %v871
        %vm1126 = vweird.f32 %v1119
        %vm1127 = vmor %vm1125, %vm1126
        %v1128 = vsel %vm1127, %v1119, %v1124
        %v1129 = vrsqrt.pop %v872
        %v1130 = vmul.f32 %v1129, %v872
        %v1131 = vmul.f32 %v1130, %v1129
        %v1132 = vmul.f32 0.5, %v1131
        %v1133 = vsub.f32 1.5, %v1132
        %v1134 = vmul.f32 %v1129, %v1133
        %vm1135 = vweird.f32 %v872
        %vm1136 = vweird.f32 %v1129
        %vm1137 = vmor %vm1135, %vm1136
        %v1138 = vsel %vm1137, %v1129, %v1134
        %v1139 = vrsqrt.pop %v873
        %v1140 = vmul.f32 %v1139, %v873
        %v1141 = vmul.f32 %v1140, %v1139
        %v1142 = vmul.f32 0.5, %v1141
        %v1143 = vsub.f32 1.5, %v1142
        %v1144 = vmul.f32 %v1139, %v1143
        %vm1145 = vweird.f32 %v873
        %vm1146 = vweird.f32 %v1139
        %vm1147 = vmor %vm1145, %vm1146
        %v1148 = vsel %vm1147, %v1139, %v1144
        %v1149 = vrsqrt.pop %v874
        %v1150 = vmul.f32 %v1149, %v874
        %v1151 = vmul.f32 %v1150, %v1149
        %v1152 = vmul.f32 0.5, %v1151
        %v1153 = vsub.f32 1.5, %v1152
        %v1154 = vmul.f32 %v1149, %v1153
        %vm1155 = vweird.f32 %v874
        %vm1156 = vweird.f32 %v1149
        %vm1157 = vmor %vm1155, %vm1156
        %v1158 = vsel %vm1157, %v1149, %v1154
        %v1159 = vrsqrt.pop %v875
        %v1160 = vmul.f32 %v1159, %v875
        %v1161 = vmul.f32 %v1160, %v1159
        %v1162 = vmul.f32 0.5, %v1161
        %v1163 = vsub.f32 1.5, %v1162
        %v1164 = vmul.f32 %v1159, %v1163
        %vm1165 = vweird.f32 %v875
        %vm1166 = vweird.f32 %v1159
        %vm1167 = vmor %vm1165, %vm1166
        %v1168 = vsel %vm1167, %v1159, %v1164
        %v1169 = vrsqrt.pop %v876
        %v1170 = vmul.f32 %v1169, %v876
        %v1171 = vmul.f32 %v1170, %v1169
        %v1172 = vmul.f32 0.5, %v1171
        %v1173 = vsub.f32 1.5, %v1172
        %v1174 = vmul.f32 %v1169, %v1173
        %vm1175 = vweird.f32 %v876
        %vm1176 = vweird.f32 %v1169
        %vm1177 = vmor %vm1175, %vm1176
        %v1178 = vsel %vm1177, %v1169, %v1174
        %v1179 = vrsqrt.pop %v877
        %v1180 = vmul.f32 %v1179, %v877
        %v1181 = vmul.f32 %v1180, %v1179
        %v1182 = vmul.f32 0.5, %v1181
        %v1183 = vsub.f32 1.5, %v1182
        %v1184 = vmul.f32 %v1179, %v1183
        %vm1185 = vweird.f32 %v877
        %vm1186 = vweird.f32 %v1179
        %vm1187 = vmor %vm1185, %vm1186
        %v1188 = vsel %vm1187, %v1179, %v1184
        %v1189 = vrsqrt.pop %v878
        %v1190 = vmul.f32 %v1189, %v878
        %v1191 = vmul.f32 %v1190, %v1189
        %v1192 = vmul.f32 0.5, %v1191
        %v1193 = vsub.f32 1.5, %v1192
        %v1194 = vmul.f32 %v1189, %v1193
        %vm1195 = vweird.f32 %v878
        %vm1196 = vweird.f32 %v1189
        %vm1197 = vmor %vm1195, %vm1196
        %v1198 = vsel %vm1197, %v1189, %v1194
        %v1199 = vmul.f32 %v687, %v888
        %v1200 = vmul.f32 %v688, %v898
        %v1201 = vmul.f32 %v689, %v908
        %v1202 = vmul.f32 %v690, %v918
        %v1203 = vmul.f32 %v691, %v928
        %v1204 = vmul.f32 %v692, %v938
        %v1205 = vmul.f32 %v693, %v948
        %v1206 = vmul.f32 %v694, %v958
        %v1207 = vmul.f32 %v695, %v968
        %v1208 = vmul.f32 %v696, %v978
        %v1209 = vmul.f32 %v697, %v988
        %v1210 = vmul.f32 %v698, %v998
        %v1211 = vmul.f32 %v699, %v1008
        %v1212 = vmul.f32 %v700, %v1018
        %v1213 = vmul.f32 %v701, %v1028
        %v1214 = vmul.f32 %v702, %v1038
        %v1215 = vmul.f32 %v703, %v1048
        %v1216 = vmul.f32 %v704, %v1058
        %v1217 = vmul.f32 %v705, %v1068
        %v1218 = vmul.f32 %v706, %v1078
        %v1219 = vmul.f32 %v707, %v1088
        %v1220 = vmul.f32 %v708, %v1098
        %v1221 = vmul.f32 %v709, %v1108
        %v1222 = vmul.f32 %v710, %v1118
        %v1223 = vmul.f32 %v711, %v1128
        %v1224 = vmul.f32 %v712, %v1138
        %v1225 = vmul.f32 %v713, %v1148
        %v1226 = vmul.f32 %v714, %v1158
        %v1227 = vmul.f32 %v715, %v1168
        %v1228 = vmul.f32 %v716, %v1178
        %v1229 = vmul.f32 %v717, %v1188
        %v1230 = vmul.f32 %v718, %v1198
        %v1231 = vld [vmem:[%s3] sm:$0x1]
        %v1233 = vperm.slane %v1231, 0
        %v1235 = vmul.f32 %v1199, %v1233
        %v1236 = vmul.f32 %v1200, %v1233
        %v1237 = vmul.f32 %v1201, %v1233
        %v1238 = vmul.f32 %v1202, %v1233
        %v1239 = vmul.f32 %v1203, %v1233
        %v1240 = vmul.f32 %v1204, %v1233
        %v1241 = vmul.f32 %v1205, %v1233
        %v1242 = vmul.f32 %v1206, %v1233
        %v1243 = vmul.f32 %v1207, %v1233
        %v1244 = vmul.f32 %v1208, %v1233
        %v1245 = vmul.f32 %v1209, %v1233
        %v1246 = vmul.f32 %v1210, %v1233
        %v1247 = vmul.f32 %v1211, %v1233
        %v1248 = vmul.f32 %v1212, %v1233
        %v1249 = vmul.f32 %v1213, %v1233
        %v1250 = vmul.f32 %v1214, %v1233
        %v1251 = vmul.f32 %v1215, %v1233
        %v1252 = vmul.f32 %v1216, %v1233
        %v1253 = vmul.f32 %v1217, %v1233
        %v1254 = vmul.f32 %v1218, %v1233
        %v1255 = vmul.f32 %v1219, %v1233
        %v1256 = vmul.f32 %v1220, %v1233
        %v1257 = vmul.f32 %v1221, %v1233
        %v1258 = vmul.f32 %v1222, %v1233
        %v1259 = vmul.f32 %v1223, %v1233
        %v1260 = vmul.f32 %v1224, %v1233
        %v1261 = vmul.f32 %v1225, %v1233
        %v1262 = vmul.f32 %v1226, %v1233
        %v1263 = vmul.f32 %v1227, %v1233
        %v1264 = vmul.f32 %v1228, %v1233
        %v1265 = vmul.f32 %v1229, %v1233
        %v1266 = vmul.f32 %v1230, %v1233
        %v1267 = vld [vmem:[%s4] sm:$0x1]
        %v1269 = vperm.slane %v1267, 0
        %v1271 = vadd.f32 %v1235, %v1269
        %v1272 = vadd.f32 %v1236, %v1269
        %v1273 = vadd.f32 %v1237, %v1269
        %v1274 = vadd.f32 %v1238, %v1269
        %v1275 = vadd.f32 %v1239, %v1269
        %v1276 = vadd.f32 %v1240, %v1269
        %v1277 = vadd.f32 %v1241, %v1269
        %v1278 = vadd.f32 %v1242, %v1269
        %v1279 = vadd.f32 %v1243, %v1269
        %v1280 = vadd.f32 %v1244, %v1269
        %v1281 = vadd.f32 %v1245, %v1269
        %v1282 = vadd.f32 %v1246, %v1269
        %v1283 = vadd.f32 %v1247, %v1269
        %v1284 = vadd.f32 %v1248, %v1269
        %v1285 = vadd.f32 %v1249, %v1269
        %v1286 = vadd.f32 %v1250, %v1269
        %v1287 = vadd.f32 %v1251, %v1269
        %v1288 = vadd.f32 %v1252, %v1269
        %v1289 = vadd.f32 %v1253, %v1269
        %v1290 = vadd.f32 %v1254, %v1269
        %v1291 = vadd.f32 %v1255, %v1269
        %v1292 = vadd.f32 %v1256, %v1269
        %v1293 = vadd.f32 %v1257, %v1269
        %v1294 = vadd.f32 %v1258, %v1269
        %v1295 = vadd.f32 %v1259, %v1269
        %v1296 = vadd.f32 %v1260, %v1269
        %v1297 = vadd.f32 %v1261, %v1269
        %v1298 = vadd.f32 %v1262, %v1269
        %v1299 = vadd.f32 %v1263, %v1269
        %v1300 = vadd.f32 %v1264, %v1269
        %v1301 = vadd.f32 %v1265, %v1269
        %v1302 = vadd.f32 %v1266, %v1269
        %v1303 = vmax.f32 %v1271, 0.0
        %v1304 = vmax.f32 %v1272, 0.0
        %v1305 = vmax.f32 %v1273, 0.0
        %v1306 = vmax.f32 %v1274, 0.0
        %v1307 = vmax.f32 %v1275, 0.0
        %v1308 = vmax.f32 %v1276, 0.0
        %v1309 = vmax.f32 %v1277, 0.0
        %v1310 = vmax.f32 %v1278, 0.0
        %v1311 = vmax.f32 %v1279, 0.0
        %v1312 = vmax.f32 %v1280, 0.0
        %v1313 = vmax.f32 %v1281, 0.0
        %v1314 = vmax.f32 %v1282, 0.0
        %v1315 = vmax.f32 %v1283, 0.0
        %v1316 = vmax.f32 %v1284, 0.0
        %v1317 = vmax.f32 %v1285, 0.0
        %v1318 = vmax.f32 %v1286, 0.0
        %v1319 = vmax.f32 %v1287, 0.0
        %v1320 = vmax.f32 %v1288, 0.0
        %v1321 = vmax.f32 %v1289, 0.0
        %v1322 = vmax.f32 %v1290, 0.0
        %v1323 = vmax.f32 %v1291, 0.0
        %v1324 = vmax.f32 %v1292, 0.0
        %v1325 = vmax.f32 %v1293, 0.0
        %v1326 = vmax.f32 %v1294, 0.0
        %v1327 = vmax.f32 %v1295, 0.0
        %v1328 = vmax.f32 %v1296, 0.0
        %v1329 = vmax.f32 %v1297, 0.0
        %v1330 = vmax.f32 %v1298, 0.0
        %v1331 = vmax.f32 %v1299, 0.0
        %v1332 = vmax.f32 %v1300, 0.0
        %v1333 = vmax.f32 %v1301, 0.0
        %v1334 = vmax.f32 %v1302, 0.0
        %1335 = vst [vmem:[%s262] sm:$0xff] %v1303
        %1336 = vst [vmem:[%s262 + $0x8] sm:$0xff] %v1304
        %1337 = vst [vmem:[%s262 + $0x10] sm:$0xff] %v1305
        %1338 = vst [vmem:[%s262 + $0x18] sm:$0xff] %v1306
        %1339 = vst [vmem:[%s262 + $0x20] sm:$0xff] %v1307
        %1340 = vst [vmem:[%s262 + $0x28] sm:$0xff] %v1308
        %1341 = vst [vmem:[%s262 + $0x30] sm:$0xff] %v1309
        %1342 = vst [vmem:[%s262 + $0x38] sm:$0xff] %v1310
        %1343 = vst [vmem:[%s262 + $0x40] sm:$0xff] %v1311
        %1344 = vst [vmem:[%s262 + $0x48] sm:$0xff] %v1312
        %1345 = vst [vmem:[%s262 + $0x50] sm:$0xff] %v1313
        %1346 = vst [vmem:[%s262 + $0x58] sm:$0xff] %v1314
        %1347 = vst [vmem:[%s262 + $0x60] sm:$0xff] %v1315
        %1348 = vst [vmem:[%s262 + $0x68] sm:$0xff] %v1316
        %1349 = vst [vmem:[%s262 + $0x70] sm:$0xff] %v1317
        %1350 = vst [vmem:[%s262 + $0x78] sm:$0xff] %v1318
        %1351 = vst [vmem:[%s262 + $0x80] sm:$0xff] %v1319
        %1352 = vst [vmem:[%s262 + $0x88] sm:$0xff] %v1320
        %1353 = vst [vmem:[%s262 + $0x90] sm:$0xff] %v1321
        %1354 = vst [vmem:[%s262 + $0x98] sm:$0xff] %v1322
        %1355 = vst [vmem:[%s262 + $0xa0] sm:$0xff] %v1323
        %1356 = vst [vmem:[%s262 + $0xa8] sm:$0xff] %v1324
        %1357 = vst [vmem:[%s262 + $0xb0] sm:$0xff] %v1325
        %1358 = vst [vmem:[%s262 + $0xb8] sm:$0xff] %v1326
        %1359 = vst [vmem:[%s262 + $0xc0] sm:$0xff] %v1327
        %1360 = vst [vmem:[%s262 + $0xc8] sm:$0xff] %v1328
        %1361 = vst [vmem:[%s262 + $0xd0] sm:$0xff] %v1329
        %1362 = vst [vmem:[%s262 + $0xd8] sm:$0xff] %v1330
        %1363 = vst [vmem:[%s262 + $0xe0] sm:$0xff] %v1331
        %1364 = vst [vmem:[%s262 + $0xe8] sm:$0xff] %v1332
        %1365 = vst [vmem:[%s262 + $0xf0] sm:$0xff] %v1333
        %1366 = vst [vmem:[%s262 + $0xf8] sm:$0xff] %v1334
        %s1367 = sand.u32 %s141, 1
        %s1368 = scalar_lea.sflag [#allocation4], %s1367
        %s1369 = sand.u32 %s141, 1
        %s1370 = smul.addr %s1369, 256
        %s1371 = scalar_lea.vmem [#allocation7], %s1370
        // Predicated region
        $region49: #{_mlp_block_impl.1} parent=39 // pred_check
          %p1372 = pneg %p151
        $region50: #{_mlp_block_impl.1} parent=39 // pred_check_branch
          %1374 = sbr.rel (%p1372) target = $region52
        $region51: #{_mlp_block_impl.1} parent=39 // pred_region
          %s1375 = smul.u32 32, %s23
          %1377 = vsyncadd %s1368, 0
          %s1378 = smul.addr %s1375, 8
          %s1379 = scalar_lea.hbm %s5, %s1378
          %s1380 = sshll.u32 %s1371, 4
          %s1381 = int_to_ptr.vmem [resolvable:$true] %s1380
          %s1382 = sshll.u32 %s1379, 4
          %s1383 = int_to_ptr.hbm [resolvable:$true] %s1382
          %1388 = dma.vmem_to_hbm [thread:$0]  %s1381, 4096, %s1383, %s1368, 128, 128, 8
        $region52: #{_mlp_block_impl.1} parent=39 // pred_fallthru
          _
      $region40: #{_mlp_block_impl.1} parent=5 // pred_fallthru
        _
      %p1389 = scmp.le.s32.totalorder 2, %s18
      // Predicated region
      $region53: #{_mlp_block_impl.1} parent=5 // pred_check
        %p1390 = pneg %p1389
      $region54: #{_mlp_block_impl.1} parent=5 // pred_check_branch
        %1392 = sbr.rel (%p1390) target = $region56
      $region55: #{_mlp_block_impl.1} parent=5 // pred_region
        %s1393 = ssub.s32 %s18, 2
        // Predicated region
        $region57: #{_mlp_block_impl.1} parent=55 // pred_check
          %p1394 = pneg %p157
        $region58: #{_mlp_block_impl.1} parent=55 // pred_check_branch
          %1396 = sbr.rel (%p1394) target = $region60
        $region59: #{_mlp_block_impl.1} parent=55 // pred_region
          %s1397 = sand.u32 %s142, 1
          %s1398 = scalar_lea.sflag [#allocation4], %s1397
          %s1399 = sand.u32 %s142, 1
          %s1400 = smul.addr %s1399, 256
          %s1401 = scalar_lea.vmem [#allocation7], %s1400
          %1403 = dma.done %s1398, 4096
        $region60: #{_mlp_block_impl.1} parent=55 // pred_fallthru
          _
      $region56: #{_mlp_block_impl.1} parent=5 // pred_fallthru
        _
    $region6: #{_mlp_block_impl.1} parent=1 // loop_footer
      %s22 = sadd.s32 1, %s18
    $region7: #{_mlp_block_impl.1} parent=1 // loop_footer_branch
      %17 = sbr.rel target = $region3
    $region8: #{_mlp_block_impl.1} parent=1 // loop_exit
      _
    %1404 = vsyncpa [#allocation3], 1
    %s1405 = scalar_lea.sflag [#allocation3], 1
    %1406 = vsyncpa %s1405, 1
    %1407 = vsyncpa [#allocation6], 1
    %1408 = vsyncpa [#allocation4], 1
    %s1409 = scalar_lea.sflag [#allocation4], 1
    %1410 = vsyncpa %s1409, 1

</llo_original>
